<compile_context>
chip_gen: v7x
topology: tpu7x:2x2x1
jax: 0.10.0
libtpu: 0.0.40
codegen_flags: <defaults>
</compile_context>

<pallas_src>
import jax
import jax.numpy as jnp
from jax.experimental import pallas as pl
from jax.experimental.pallas import tpu as pltpu

# ---- model dims (from TrainM.__init__) -------------------------------------
D_IN, D_H1, D_H2, D_H3, D_OUT = 784, 200, 150, 100, 10
# lane-padded widths (multiples of 128 so all matmul outputs are lane-dense)
H1P, H2P, OUTP = 256, 256, 128


# ---- fused MLP kernel (one batch tile per grid step) ------------------------
def trainm_kernel(x_ref,
                  w1_ref, b1_ref,
                  w2_ref, b2_ref,
                  w34_ref, b34_ref,
                  o_ref):
    x = x_ref[...]                                           # (TM, 784) bf16

    # fx1 (dropout on the input is identity in eval mode); bias + ReLU in f32
    h1 = jnp.dot(x, w1_ref[...], preferred_element_type=jnp.float32) + b1_ref[...]
    h1 = jnp.maximum(h1, 0.0)

    # fx2 — note: NO ReLU / dropout between fx2 and fx3 in the reference graph
    h2 = jnp.dot(h1.astype(jnp.bfloat16), w2_ref[...],
                 preferred_element_type=jnp.float32) + b2_ref[...]

    # fx3 · fx4 fused offline into a single linear (valid: no nonlinearity between)
    y = jnp.dot(h2.astype(jnp.bfloat16), w34_ref[...],
                preferred_element_type=jnp.float32) + b34_ref[...]

    o_ref[...] = y.astype(o_ref.dtype)                       # (TM, 128) f32


def trainm_forward(x, prepped, *, tm=256):
    """x: (B, 784) float/bf16; prepped: dict from prepare_params()."""
    B = x.shape[0]
    tm = min(tm, max(8, B))                # don't over-tile tiny batches
    Bp = pl.cdiv(B, tm) * tm
    x = x.astype(jnp.bfloat16)
    if Bp != B:
        x = jnp.pad(x, ((0, Bp - B), (0, 0)))

    grid = (Bp // tm,)

    # x / out tiles walk the batch; weights & biases stay VMEM-resident.
    in_specs = [
        pl.BlockSpec((tm, D_IN), lambda i: (i, 0)),          # x tile
        pl.BlockSpec((D_IN, H1P), lambda i: (0, 0)),         # W1 (resident)
        pl.BlockSpec((1, H1P),    lambda i: (0, 0)),         # b1
        pl.BlockSpec((H1P, H2P),  lambda i: (0, 0)),         # W2
        pl.BlockSpec((1, H2P),    lambda i: (0, 0)),         # b2
        pl.BlockSpec((H2P, OUTP), lambda i: (0, 0)),         # W34 (fused fx3·fx4)
        pl.BlockSpec((1, OUTP),   lambda i: (0, 0)),         # b34
    ]
    out_specs = pl.BlockSpec((tm, OUTP), lambda i: (i, 0))

    flops = 2 * Bp * (D_IN * H1P + H1P * H2P + H2P * OUTP)
    bytes_accessed = (
        Bp * D_IN * 2                                    # x (bf16)
        + (D_IN * H1P + H1P * H2P + H2P * OUTP) * 2      # weights (bf16)
        + (H1P + H2P + OUTP) * 4                         # biases (f32)
        + Bp * OUTP * 4                                  # output (f32)
    )

    out = pl.pallas_call(
        trainm_kernel,
        out_shape=jax.ShapeDtypeStruct((Bp, OUTP), jnp.float32),
        grid=grid,
        in_specs=in_specs,
        out_specs=out_specs,
        compiler_params=pltpu.CompilerParams(
            dimension_semantics=("parallel",)),
        cost_estimate=pl.CostEstimate(
            flops=flops, bytes_accessed=bytes_accessed, transcendentals=0),
    )(x,
      prepped["w1"], prepped["b1"],
      prepped["w2"], prepped["b2"],
      prepped["w34"], prepped["b34"])

    return out[:B, :D_OUT]


# ---- deterministic parameter init (PyTorch Linear default: U(±1/sqrt(fan_in)))
def init_params(key):
    def linear(key, fan_in, fan_out):
        kw, kb = jax.random.split(key)
        bound = 1.0 / jnp.sqrt(fan_in)
        # stored already transposed: (in, out); bias kept 2-D (1, out)
        w = jax.random.uniform(kw, (fan_in, fan_out), jnp.float32, -bound, bound)
        b = jax.random.uniform(kb, (1, fan_out), jnp.float32, -bound, bound)
        return w, b

    k1, k2, k3, k4 = jax.random.split(key, 4)
    w1, b1 = linear(k1, D_IN, D_H1)
    w2, b2 = linear(k2, D_H1, D_H2)
    w3, b3 = linear(k3, D_H2, D_H3)
    w4, b4 = linear(k4, D_H3, D_OUT)
    return dict(w1=w1, b1=b1, w2=w2, b2=b2, w3=w3, b3=b3, w4=w4, b4=b4)


# ---- offline prep: fuse fx3·fx4, zero-pad to lane multiples, cast to bf16 ----
def prepare_params(p):
    def pad2(a, rows, cols):
        return jnp.pad(a, ((0, rows - a.shape[0]), (0, cols - a.shape[1])))

    w34 = p["w3"] @ p["w4"]                     # (150, 10)
    b34 = p["b3"] @ p["w4"] + p["b4"]           # (1, 10)
    return dict(
        w1=pad2(p["w1"], D_IN, H1P).astype(jnp.bfloat16),
        b1=pad2(p["b1"], 1, H1P).astype(jnp.float32),
        w2=pad2(p["w2"], H1P, H2P).astype(jnp.bfloat16),
        b2=pad2(p["b2"], 1, H2P).astype(jnp.float32),
        w34=pad2(w34, H2P, OUTP).astype(jnp.bfloat16),
        b34=pad2(b34, 1, OUTP).astype(jnp.float32),
    )


# ---- references ---------------------------------------------------------------
def trainm_ref_f32(x, p):
    """Exact f32 reference of the original module (eval mode)."""
    y = x @ p["w1"] + p["b1"]
    y = jnp.maximum(y, 0.0)
    y = y @ p["w2"] + p["b2"]
    y = y @ p["w3"] + p["b3"]
    y = y @ p["w4"] + p["b4"]
    return y


def trainm_ref_bf16(x, pp):
    """Same math as the kernel (bf16 inputs, f32 accumulation) in plain JAX."""
    xb = x.astype(jnp.bfloat16)
    h1 = jnp.dot(xb, pp["w1"], preferred_element_type=jnp.float32) + pp["b1"]
    h1 = jnp.maximum(h1, 0.0)
    h2 = jnp.dot(h1.astype(jnp.bfloat16), pp["w2"],
                 preferred_element_type=jnp.float32) + pp["b2"]
    y = jnp.dot(h2.astype(jnp.bfloat16), pp["w34"],
                preferred_element_type=jnp.float32) + pp["b34"]
    return y[:, :D_OUT]


if __name__ == "__main__":
    key = jax.random.PRNGKey(0)
    kx, kp = jax.random.split(key)

    B = 512                                   # >= 256 rows keeps the MXU busy
    x = jax.random.normal(kx, (B, D_IN), jnp.float32)   # flattened 28x28 images
    params = init_params(kp)
    prepped = prepare_params(params)

    out = trainm_forward(x, prepped, tm=256)
    out = jax.block_until_ready(out)
    assert out.shape == (B, D_OUT)

    # tight check vs. same-precision reference
    ref_bf16 = trainm_ref_bf16(x, prepped)
    assert jnp.allclose(out, ref_bf16, atol=5e-3, rtol=5e-3), "mismatch vs bf16 ref"

    # loose check vs. exact f32 reference of the original module
    ref_f32 = trainm_ref_f32(x, params)
    assert jnp.allclose(out, ref_f32, atol=5e-2, rtol=5e-2), "mismatch vs f32 ref"

    print("KERNEL_OK")
</pallas_src>

<mosaic_0001>
module attributes {stable_mosaic.version = 11 : i64} {
  func.func @trainm_kernel(%arg0: i32, %arg1: memref<256x784xbf16, #tpu.memory_space<vmem>>, %arg2: memref<784x256xbf16, #tpu.memory_space<vmem>>, %arg3: memref<1x256xf32, #tpu.memory_space<vmem>>, %arg4: memref<256x256xbf16, #tpu.memory_space<vmem>>, %arg5: memref<1x256xf32, #tpu.memory_space<vmem>>, %arg6: memref<256x128xbf16, #tpu.memory_space<vmem>>, %arg7: memref<1x128xf32, #tpu.memory_space<vmem>>, %arg8: memref<256x128xf32, #tpu.memory_space<vmem>>) attributes {dimension_semantics = [#tpu.dimension_semantics<parallel>], iteration_bounds = array<i64: 2>, scalar_prefetch = 0 : i64, scratch_operands = 0 : i64, tpu.core_type = #tpu.core_type<tc>, window_params = [{transform_indices = @transform_0, window_bounds = array<i64: 256, 784>}, {pipeline_mode = #tpu.pipeline_mode<synchronous>, transform_indices = @transform_1, window_bounds = array<i64: 784, 256>}, {pipeline_mode = #tpu.pipeline_mode<synchronous>, transform_indices = @transform_2, window_bounds = array<i64: 1, 256>}, {pipeline_mode = #tpu.pipeline_mode<synchronous>, transform_indices = @transform_3, window_bounds = array<i64: 256, 256>}, {pipeline_mode = #tpu.pipeline_mode<synchronous>, transform_indices = @transform_4, window_bounds = array<i64: 1, 256>}, {pipeline_mode = #tpu.pipeline_mode<synchronous>, transform_indices = @transform_5, window_bounds = array<i64: 256, 128>}, {pipeline_mode = #tpu.pipeline_mode<synchronous>, transform_indices = @transform_6, window_bounds = array<i64: 1, 128>}, {transform_indices = @transform_7, window_bounds = array<i64: 256, 128>}]} {
    %c0 = arith.constant 0 : index
    %c0_0 = arith.constant 0 : index
    %0 = vector.load %arg1[%c0, %c0_0] : memref<256x784xbf16, #tpu.memory_space<vmem>>, vector<256x784xbf16>
    %c0_1 = arith.constant 0 : index
    %c0_2 = arith.constant 0 : index
    %1 = vector.load %arg2[%c0_1, %c0_2] : memref<784x256xbf16, #tpu.memory_space<vmem>>, vector<784x256xbf16>
    %cst = arith.constant dense<0.000000e+00> : vector<256x256xf32>
    %2 = tpu.matmul %0, %1, %cst {dimension_numbers = #tpu.dot_dimension_numbers<[1], [0], [0], [1], [0, 0, 1, 1], [], []>} : vector<256x784xbf16>, vector<784x256xbf16>, vector<256x256xf32> -> vector<256x256xf32>
    %c0_3 = arith.constant 0 : index
    %c0_4 = arith.constant 0 : index
    %3 = vector.load %arg3[%c0_3, %c0_4] : memref<1x256xf32, #tpu.memory_space<vmem>>, vector<1x256xf32>
    %4 = vector.broadcast %3 : vector<1x256xf32> to vector<256x256xf32>
    %5 = arith.addf %2, %4 : vector<256x256xf32>
    %cst_5 = arith.constant 0.000000e+00 : f32
    %6 = vector.broadcast %cst_5 : f32 to vector<256x256xf32>
    %7 = arith.maximumf %5, %6 : vector<256x256xf32>
    %8 = arith.truncf %7 : vector<256x256xf32> to vector<256x256xbf16>
    %c0_6 = arith.constant 0 : index
    %c0_7 = arith.constant 0 : index
    %9 = vector.load %arg4[%c0_6, %c0_7] : memref<256x256xbf16, #tpu.memory_space<vmem>>, vector<256x256xbf16>
    %cst_8 = arith.constant dense<0.000000e+00> : vector<256x256xf32>
    %10 = tpu.matmul %8, %9, %cst_8 {dimension_numbers = #tpu.dot_dimension_numbers<[1], [0], [0], [1], [0, 0, 1, 1], [], []>} : vector<256x256xbf16>, vector<256x256xbf16>, vector<256x256xf32> -> vector<256x256xf32>
    %c0_9 = arith.constant 0 : index
    %c0_10 = arith.constant 0 : index
    %11 = vector.load %arg5[%c0_9, %c0_10] : memref<1x256xf32, #tpu.memory_space<vmem>>, vector<1x256xf32>
    %12 = vector.broadcast %11 : vector<1x256xf32> to vector<256x256xf32>
    %13 = arith.addf %10, %12 : vector<256x256xf32>
    %14 = arith.truncf %13 : vector<256x256xf32> to vector<256x256xbf16>
    %c0_11 = arith.constant 0 : index
    %c0_12 = arith.constant 0 : index
    %15 = vector.load %arg6[%c0_11, %c0_12] : memref<256x128xbf16, #tpu.memory_space<vmem>>, vector<256x128xbf16>
    %cst_13 = arith.constant dense<0.000000e+00> : vector<256x128xf32>
    %16 = tpu.matmul %14, %15, %cst_13 {dimension_numbers = #tpu.dot_dimension_numbers<[1], [0], [0], [1], [0, 0, 1, 1], [], []>} : vector<256x256xbf16>, vector<256x128xbf16>, vector<256x128xf32> -> vector<256x128xf32>
    %c0_14 = arith.constant 0 : index
    %c0_15 = arith.constant 0 : index
    %17 = vector.load %arg7[%c0_14, %c0_15] : memref<1x128xf32, #tpu.memory_space<vmem>>, vector<1x128xf32>
    %18 = vector.broadcast %17 : vector<1x128xf32> to vector<256x128xf32>
    %19 = arith.addf %16, %18 : vector<256x128xf32>
    %c0_16 = arith.constant 0 : index
    %c0_17 = arith.constant 0 : index
    %20 = vector.load %arg8[%c0_16, %c0_17] : memref<256x128xf32, #tpu.memory_space<vmem>>, vector<256x128xf32>
    tpu.vector_store %arg8[%c0_16, %c0_17], %19 {strides = array<i32>} : memref<256x128xf32, #tpu.memory_space<vmem>>, vector<256x128xf32>,
    return
  }
  func.func @transform_0(%arg0: i32) -> (i32, i32) {
    %c0_i32 = arith.constant 0 : i32
    %c0_i32_0 = arith.constant 0 : i32
    return %arg0, %c0_i32 : i32, i32
  }
  func.func @transform_1(%arg0: i32) -> (i32, i32) {
    %c0_i32 = arith.constant 0 : i32
    %c0_i32_0 = arith.constant 0 : i32
    %c0_i32_1 = arith.constant 0 : i32
    return %c0_i32, %c0_i32_0 : i32, i32
  }
  func.func @transform_2(%arg0: i32) -> (i32, i32) {
    %c0_i32 = arith.constant 0 : i32
    %c0_i32_0 = arith.constant 0 : i32
    %c0_i32_1 = arith.constant 0 : i32
    return %c0_i32, %c0_i32_0 : i32, i32
  }
  func.func @transform_3(%arg0: i32) -> (i32, i32) {
    %c0_i32 = arith.constant 0 : i32
    %c0_i32_0 = arith.constant 0 : i32
    %c0_i32_1 = arith.constant 0 : i32
    return %c0_i32, %c0_i32_0 : i32, i32
  }
  func.func @transform_4(%arg0: i32) -> (i32, i32) {
    %c0_i32 = arith.constant 0 : i32
    %c0_i32_0 = arith.constant 0 : i32
    %c0_i32_1 = arith.constant 0 : i32
    return %c0_i32, %c0_i32_0 : i32, i32
  }
  func.func @transform_5(%arg0: i32) -> (i32, i32) {
    %c0_i32 = arith.constant 0 : i32
    %c0_i32_0 = arith.constant 0 : i32
    %c0_i32_1 = arith.constant 0 : i32
    return %c0_i32, %c0_i32_0 : i32, i32
  }
  func.func @transform_6(%arg0: i32) -> (i32, i32) {
    %c0_i32 = arith.constant 0 : i32
    %c0_i32_0 = arith.constant 0 : i32
    %c0_i32_1 = arith.constant 0 : i32
    return %c0_i32, %c0_i32_0 : i32, i32
  }
  func.func @transform_7(%arg0: i32) -> (i32, i32) {
    %c0_i32 = arith.constant 0 : i32
    %c0_i32_0 = arith.constant 0 : i32
    return %arg0, %c0_i32 : i32, i32
  }
}

</mosaic_0001>

<llo_original>
// kernel: tpu_custom_call.1
$region0: #{tpu_custom_call.1}
  #allocation0 [shape = 'u32[]', space=smem, size = 0x4, offset = 0x4, fixed_abs, tag = 'smem constant byte address 0x4 - core index']
  #allocation1 [shape = 'u32[144,128]{1,0:T(1,128)}', space=vmem, size = 0x12000, scoped, tag = 'internal scratch']
  %s0 = inlined_call_operand.vmem [shape: bf16[512,784], index: 0, kind: input, shape index: {}]
  %s1 = inlined_call_operand.vmem [shape: bf16[784,256], index: 1, kind: input, shape index: {}]
  %s2 = inlined_call_operand.vmem [shape: f32[1,256], index: 2, kind: input, shape index: {}]
  %s3 = inlined_call_operand.vmem [shape: bf16[256,256], index: 3, kind: input, shape index: {}]
  %s4 = inlined_call_operand.vmem [shape: f32[1,256], index: 4, kind: input, shape index: {}]
  %s5 = inlined_call_operand.vmem [shape: bf16[256,128], index: 5, kind: input, shape index: {}]
  %s6 = inlined_call_operand.vmem [shape: f32[1,128], index: 6, kind: input, shape index: {}]
  %s7 = inlined_call_operand.hbm [shape: f32[512,128], index: 7, kind: output, shape index: {}]
  %s8 = sld [smem:[#allocation0]]
  $region61: #{tpu_custom_call.1} parent=0
    _
  %s10 = ssub.s32 1, %s8
  %s11 = scalar_select 0, %s10, %s8
  $region1: #{tpu_custom_call.1} parent=0
    #allocation2 [shape = 'u8[262144]{0}', space=vmem, size = 0x40000, scoped, tag = 'output window, operand 0']
    #allocation3 [shape = 's32[2]{0}', space=sflag, size = 0x8, scoped, tag = 'scoped memory for tpu_custom_call.1']
    %12 = vsyncpa [#allocation3], 0
    %s13 = scalar_lea.sflag [#allocation3], 1
    %14 = vsyncpa %s13, 0
    loop: start=0, step=1, limit=4
    $region2: #{tpu_custom_call.1} parent=1 // loop_pre_header
      _
    $region3: #{tpu_custom_call.1} parent=1 // loop_header
      %s16 = sphi 0, %s20
      %p17 = scmp.ge.s32.totalorder %s16, 4
      %s26 = sphi 0, %s28
      %s29 = sphi 0, %s26
      %s30 = sphi 0, %s29
      %s46 = sphi 0, %s30
      %s50 = sphi 0, %s50
      %s52 = sphi 0, %s50
      %s53 = sphi 0, %s52
      %s67 = sphi 0, %s53
      %s71 = sphi 0, %s71
      %s73 = sphi 0, %s71
      %s74 = sphi 0, %s73
      %s88 = sphi 0, %s74
      %s92 = sphi 0, %s92
      %s94 = sphi 0, %s92
      %s95 = sphi 0, %s94
      %s109 = sphi 0, %s95
      %s113 = sphi 0, %s113
      %s115 = sphi 0, %s113
      %s116 = sphi 0, %s115
      %s130 = sphi 0, %s116
      %s134 = sphi 0, %s134
      %s136 = sphi 0, %s134
      %s137 = sphi 0, %s136
      %s151 = sphi 0, %s137
      %s155 = sphi 0, %s155
      %s157 = sphi 0, %s155
      %s158 = sphi 0, %s157
      %s172 = sphi 0, %s158
      %s178 = sphi 0, %s180
      %s181 = sphi 0, %s178
      %s182 = sphi 0, %s181
      %s198 = sphi 0, %s182
    $region4: #{tpu_custom_call.1} parent=1 // loop_header_branch
      %19 = sbr.rel (%p17) target = $region8
    $region5: #{tpu_custom_call.1} parent=1 // loop_body
      %s21 = ssub.s32 %s16, 1
      %s22 = ssub.s32 %s16, 2
      %s23 = sadd.s32 %s16, 1
      %s24 = ssub.s32 %s16, %s23
      %p25 = scmp.eq.s32.totalorder %s24, 0
      %s27 = sadd.s32 %s26, 1
      %s28 = scalar_select %p25, %s26, %s27
      %p31 = pneg %p25
      %p32 = scmp.eq.s32.totalorder %s16, 1
      %p33 = por %p31, %p32
      %p34 = scmp.ne.s32.totalorder %s26, %s29
      %p35 = scmp.eq.s32.totalorder %s16, 0
      %p36 = por %p34, %p35
      %p37 = scmp.ne.s32.totalorder %s26, %s29
      %p38 = scmp.eq.s32.totalorder %s21, 1
      %p39 = por %p37, %p38
      %p40 = scmp.ne.s32.totalorder %s29, %s30
      %p41 = scmp.eq.s32.totalorder %s21, 0
      %p42 = por %p40, %p41
      %p43 = scmp.ne.s32.totalorder %s29, %s30
      %p44 = scmp.eq.s32.totalorder %s22, 1
      %p45 = por %p43, %p44
      %p47 = scmp.ne.s32.totalorder %s30, %s46
      %p48 = scmp.eq.s32.totalorder %s22, 0
      %p49 = por %p47, %p48
      %s51 = sadd.s32 %s50, 1
      %p54 = scmp.eq.s32.totalorder %s16, 1
      %p55 = scmp.ne.s32.totalorder %s50, %s52
      %p56 = scmp.eq.s32.totalorder %s16, 0
      %p57 = por %p55, %p56
      %p58 = scmp.ne.s32.totalorder %s50, %s52
      %p59 = scmp.eq.s32.totalorder %s21, 1
      %p60 = por %p58, %p59
      %p61 = scmp.ne.s32.totalorder %s52, %s53
      %p62 = scmp.eq.s32.totalorder %s21, 0
      %p63 = por %p61, %p62
      %p64 = scmp.ne.s32.totalorder %s52, %s53
      %p65 = scmp.eq.s32.totalorder %s22, 1
      %p66 = por %p64, %p65
      %p68 = scmp.ne.s32.totalorder %s53, %s67
      %p69 = scmp.eq.s32.totalorder %s22, 0
      %p70 = por %p68, %p69
      %s72 = sadd.s32 %s71, 1
      %p75 = scmp.eq.s32.totalorder %s16, 1
      %p76 = scmp.ne.s32.totalorder %s71, %s73
      %p77 = scmp.eq.s32.totalorder %s16, 0
      %p78 = por %p76, %p77
      %p79 = scmp.ne.s32.totalorder %s71, %s73
      %p80 = scmp.eq.s32.totalorder %s21, 1
      %p81 = por %p79, %p80
      %p82 = scmp.ne.s32.totalorder %s73, %s74
      %p83 = scmp.eq.s32.totalorder %s21, 0
      %p84 = por %p82, %p83
      %p85 = scmp.ne.s32.totalorder %s73, %s74
      %p86 = scmp.eq.s32.totalorder %s22, 1
      %p87 = por %p85, %p86
      %p89 = scmp.ne.s32.totalorder %s74, %s88
      %p90 = scmp.eq.s32.totalorder %s22, 0
      %p91 = por %p89, %p90
      %s93 = sadd.s32 %s92, 1
      %p96 = scmp.eq.s32.totalorder %s16, 1
      %p97 = scmp.ne.s32.totalorder %s92, %s94
      %p98 = scmp.eq.s32.totalorder %s16, 0
      %p99 = por %p97, %p98
      %p100 = scmp.ne.s32.totalorder %s92, %s94
      %p101 = scmp.eq.s32.totalorder %s21, 1
      %p102 = por %p100, %p101
      %p103 = scmp.ne.s32.totalorder %s94, %s95
      %p104 = scmp.eq.s32.totalorder %s21, 0
      %p105 = por %p103, %p104
      %p106 = scmp.ne.s32.totalorder %s94, %s95
      %p107 = scmp.eq.s32.totalorder %s22, 1
      %p108 = por %p106, %p107
      %p110 = scmp.ne.s32.totalorder %s95, %s109
      %p111 = scmp.eq.s32.totalorder %s22, 0
      %p112 = por %p110, %p111
      %s114 = sadd.s32 %s113, 1
      %p117 = scmp.eq.s32.totalorder %s16, 1
      %p118 = scmp.ne.s32.totalorder %s113, %s115
      %p119 = scmp.eq.s32.totalorder %s16, 0
      %p120 = por %p118, %p119
      %p121 = scmp.ne.s32.totalorder %s113, %s115
      %p122 = scmp.eq.s32.totalorder %s21, 1
      %p123 = por %p121, %p122
      %p124 = scmp.ne.s32.totalorder %s115, %s116
      %p125 = scmp.eq.s32.totalorder %s21, 0
      %p126 = por %p124, %p125
      %p127 = scmp.ne.s32.totalorder %s115, %s116
      %p128 = scmp.eq.s32.totalorder %s22, 1
      %p129 = por %p127, %p128
      %p131 = scmp.ne.s32.totalorder %s116, %s130
      %p132 = scmp.eq.s32.totalorder %s22, 0
      %p133 = por %p131, %p132
      %s135 = sadd.s32 %s134, 1
      %p138 = scmp.eq.s32.totalorder %s16, 1
      %p139 = scmp.ne.s32.totalorder %s134, %s136
      %p140 = scmp.eq.s32.totalorder %s16, 0
      %p141 = por %p139, %p140
      %p142 = scmp.ne.s32.totalorder %s134, %s136
      %p143 = scmp.eq.s32.totalorder %s21, 1
      %p144 = por %p142, %p143
      %p145 = scmp.ne.s32.totalorder %s136, %s137
      %p146 = scmp.eq.s32.totalorder %s21, 0
      %p147 = por %p145, %p146
      %p148 = scmp.ne.s32.totalorder %s136, %s137
      %p149 = scmp.eq.s32.totalorder %s22, 1
      %p150 = por %p148, %p149
      %p152 = scmp.ne.s32.totalorder %s137, %s151
      %p153 = scmp.eq.s32.totalorder %s22, 0
      %p154 = por %p152, %p153
      %s156 = sadd.s32 %s155, 1
      %p159 = scmp.eq.s32.totalorder %s16, 1
      %p160 = scmp.ne.s32.totalorder %s155, %s157
      %p161 = scmp.eq.s32.totalorder %s16, 0
      %p162 = por %p160, %p161
      %p163 = scmp.ne.s32.totalorder %s155, %s157
      %p164 = scmp.eq.s32.totalorder %s21, 1
      %p165 = por %p163, %p164
      %p166 = scmp.ne.s32.totalorder %s157, %s158
      %p167 = scmp.eq.s32.totalorder %s21, 0
      %p168 = por %p166, %p167
      %p169 = scmp.ne.s32.totalorder %s157, %s158
      %p170 = scmp.eq.s32.totalorder %s22, 1
      %p171 = por %p169, %p170
      %p173 = scmp.ne.s32.totalorder %s158, %s172
      %p174 = scmp.eq.s32.totalorder %s22, 0
      %p175 = por %p173, %p174
      %s176 = ssub.s32 %s16, %s23
      %p177 = scmp.eq.s32.totalorder %s176, 0
      %s179 = sadd.s32 %s178, 1
      %s180 = scalar_select %p177, %s178, %s179
      %p183 = pneg %p177
      %p184 = scmp.eq.s32.totalorder %s16, 1
      %p185 = por %p183, %p184
      %p186 = scmp.ne.s32.totalorder %s178, %s181
      %p187 = scmp.eq.s32.totalorder %s16, 0
      %p188 = por %p186, %p187
      %p189 = scmp.ne.s32.totalorder %s178, %s181
      %p190 = scmp.eq.s32.totalorder %s21, 1
      %p191 = por %p189, %p190
      %p192 = scmp.ne.s32.totalorder %s181, %s182
      %p193 = scmp.eq.s32.totalorder %s21, 0
      %p194 = por %p192, %p193
      %p195 = scmp.ne.s32.totalorder %s181, %s182
      %p196 = scmp.eq.s32.totalorder %s22, 1
      %p197 = por %p195, %p196
      %p199 = scmp.ne.s32.totalorder %s182, %s198
      %p200 = scmp.eq.s32.totalorder %s22, 0
      %p201 = por %p199, %p200
      %p202 = scmp.le.s32.totalorder 1, %s16
      %p203 = scmp.lt.s32.totalorder %s16, 3
      %p204 = pnand %p202, %p203
      %p205 = pneg %p204
      // Predicated region
      $region9: #{tpu_custom_call.1} parent=5 // pred_check
        _
      $region10: #{tpu_custom_call.1} parent=5 // pred_check_branch
        %207 = sbr.rel (%p204) target = $region12
      $region11: #{tpu_custom_call.1} parent=5 // pred_region
        %s208 = ssub.s32 %s16, 1
        // Predicated region
        $region13: #{tpu_custom_call.1} parent=11 // pred_check
          %p209 = pneg %p63
        $region14: #{tpu_custom_call.1} parent=11 // pred_check_branch
          %211 = sbr.rel (%p209) target = $region16
        $region15: #{tpu_custom_call.1} parent=11 // pred_region
          _
        $region16: #{tpu_custom_call.1} parent=11 // pred_fallthru
          _
        // Predicated region
        $region17: #{tpu_custom_call.1} parent=11 // pred_check
          %p212 = pneg %p84
        $region18: #{tpu_custom_call.1} parent=11 // pred_check_branch
          %214 = sbr.rel (%p212) target = $region20
        $region19: #{tpu_custom_call.1} parent=11 // pred_region
          _
        $region20: #{tpu_custom_call.1} parent=11 // pred_fallthru
          _
        // Predicated region
        $region21: #{tpu_custom_call.1} parent=11 // pred_check
          %p215 = pneg %p105
        $region22: #{tpu_custom_call.1} parent=11 // pred_check_branch
          %217 = sbr.rel (%p215) target = $region24
        $region23: #{tpu_custom_call.1} parent=11 // pred_region
          _
        $region24: #{tpu_custom_call.1} parent=11 // pred_fallthru
          _
        // Predicated region
        $region25: #{tpu_custom_call.1} parent=11 // pred_check
          %p218 = pneg %p126
        $region26: #{tpu_custom_call.1} parent=11 // pred_check_branch
          %220 = sbr.rel (%p218) target = $region28
        $region27: #{tpu_custom_call.1} parent=11 // pred_region
          _
        $region28: #{tpu_custom_call.1} parent=11 // pred_fallthru
          _
        // Predicated region
        $region29: #{tpu_custom_call.1} parent=11 // pred_check
          %p221 = pneg %p147
        $region30: #{tpu_custom_call.1} parent=11 // pred_check_branch
          %223 = sbr.rel (%p221) target = $region32
        $region31: #{tpu_custom_call.1} parent=11 // pred_region
          _
        $region32: #{tpu_custom_call.1} parent=11 // pred_fallthru
          _
        // Predicated region
        $region33: #{tpu_custom_call.1} parent=11 // pred_check
          %p224 = pneg %p168
        $region34: #{tpu_custom_call.1} parent=11 // pred_check_branch
          %226 = sbr.rel (%p224) target = $region36
        $region35: #{tpu_custom_call.1} parent=11 // pred_region
          _
        $region36: #{tpu_custom_call.1} parent=11 // pred_fallthru
          _
      $region12: #{tpu_custom_call.1} parent=5 // pred_fallthru
        _
      %p227 = scmp.lt.s32.totalorder %s16, 2
      // Predicated region
      $region37: #{tpu_custom_call.1} parent=5 // pred_check
        %p228 = pneg %p227
      $region38: #{tpu_custom_call.1} parent=5 // pred_check_branch
        %230 = sbr.rel (%p228) target = $region40
      $region39: #{tpu_custom_call.1} parent=5 // pred_region
        // Predicated region
        $region41: #{tpu_custom_call.1} parent=39 // pred_check
          %p231 = pneg %p36
        $region42: #{tpu_custom_call.1} parent=39 // pred_check_branch
          %233 = sbr.rel (%p231) target = $region44
        $region43: #{tpu_custom_call.1} parent=39 // pred_region
          %s234 = smul.u32 32, %s16
          %p235 = scmp.lt.s32.totalorder %s234, 63
          %s236 = scalar_select %p235, %s234, 63
          %s237 = smul.addr %s236, 7
          %s238 = smul.addr %s237, 4
          %s239 = scalar_lea.vmem %s0, %s238
          %s240 = smul.u32 32, %s16
        $region44: #{tpu_custom_call.1} parent=39 // pred_fallthru
          _
      $region40: #{tpu_custom_call.1} parent=5 // pred_fallthru
        _
      %p241 = scmp.le.s32.totalorder 1, %s16
      %p242 = scmp.lt.s32.totalorder %s16, 3
      %p243 = pnand %p241, %p242
      %p244 = pneg %p243
      // Predicated region
      $region45: #{tpu_custom_call.1} parent=5 // pred_check
        _
      $region46: #{tpu_custom_call.1} parent=5 // pred_check_branch
        %246 = sbr.rel (%p243) target = $region48
      $region47: #{tpu_custom_call.1} parent=5 // pred_region
        %s247 = ssub.s32 %s16, 1
        %s248 = smul.u32 32, %s21
        %p249 = scmp.lt.s32.totalorder %s248, 63
        %s250 = scalar_select %p249, %s248, 63
        %s251 = smul.addr %s250, 7
        %s252 = smul.addr %s251, 4
        %s253 = scalar_lea.vmem %s0, %s252
        %p254 = pneg %p42
        %p255 = pneg %p39
        %p256 = pneg %p63
        %p257 = pneg %p60
        %p258 = pneg %p84
        %p259 = pneg %p81
        %p260 = pneg %p105
        %p261 = pneg %p102
        %p262 = pneg %p126
        %p263 = pneg %p123
        %p264 = pneg %p147
        %p265 = pneg %p144
        %p266 = pneg %p168
        %p267 = pneg %p165
        %p268 = pneg %p194
        %p269 = pneg %p191
        %s270 = sand.u32 %s181, 1
        %s271 = scalar_lea.sflag [#allocation3], %s270
        %s272 = sand.u32 %s181, 1
        %s273 = smul.addr %s272, 256
        %s274 = scalar_lea.vmem [#allocation2], %s273
        %s275 = smul.u32 32, %s21
        %p276 = scmp.lt.s32.totalorder %s275, 63
        %s277 = scalar_select %p276, %s275, 63
        %s278 = smul.addr %s277, 7
        %s279 = smul.addr %s278, 4
        %s280 = scalar_lea.vmem %s0, %s279
        %s281 = smul.u32 32, %s21
        %s282 = smul.u32 32, %s21
        %v284 = vld [vmem:[%s280] sm:$0xff]
        %v285 = vld [vmem:[%s280 + $0x8] sm:$0xff]
        %v286 = vld [vmem:[%s280 + $0x10] sm:$0xff]
        %v287 = vld [vmem:[%s280 + $0x18] sm:$0xf]
        %v288 = vld [vmem:[%s280 + $0x1c] sm:$0xff]
        %v289 = vld [vmem:[%s280 + $0x24] sm:$0xff]
        %v290 = vld [vmem:[%s280 + $0x2c] sm:$0xff]
        %v291 = vld [vmem:[%s280 + $0x34] sm:$0xf]
        %v292 = vld [vmem:[%s280 + $0x38] sm:$0xff]
        %v293 = vld [vmem:[%s280 + $0x40] sm:$0xff]
        %v294 = vld [vmem:[%s280 + $0x48] sm:$0xff]
        %v295 = vld [vmem:[%s280 + $0x50] sm:$0xf]
        %v296 = vld [vmem:[%s280 + $0x54] sm:$0xff]
        %v297 = vld [vmem:[%s280 + $0x5c] sm:$0xff]
        %v298 = vld [vmem:[%s280 + $0x64] sm:$0xff]
        %v299 = vld [vmem:[%s280 + $0x6c] sm:$0xf]
        %v300 = vld [vmem:[%s280 + $0x70] sm:$0xff]
        %v301 = vld [vmem:[%s280 + $0x78] sm:$0xff]
        %v302 = vld [vmem:[%s280 + $0x80] sm:$0xff]
        %v303 = vld [vmem:[%s280 + $0x88] sm:$0xf]
        %v304 = vld [vmem:[%s280 + $0x8c] sm:$0xff]
        %v305 = vld [vmem:[%s280 + $0x94] sm:$0xff]
        %v306 = vld [vmem:[%s280 + $0x9c] sm:$0xff]
        %v307 = vld [vmem:[%s280 + $0xa4] sm:$0xf]
        %v308 = vld [vmem:[%s280 + $0xa8] sm:$0xff]
        %v309 = vld [vmem:[%s280 + $0xb0] sm:$0xff]
        %v310 = vld [vmem:[%s280 + $0xb8] sm:$0xff]
        %v311 = vld [vmem:[%s280 + $0xc0] sm:$0xf]
        %v312 = vld [vmem:[%s280 + $0xc4] sm:$0xff]
        %v313 = vld [vmem:[%s280 + $0xcc] sm:$0xff]
        %v314 = vld [vmem:[%s280 + $0xd4] sm:$0xff]
        %v315 = vld [vmem:[%s280 + $0xdc] sm:$0xf]
        %v316 = vld [vmem:[%s280 + $0xe0] sm:$0xff]
        %v317 = vld [vmem:[%s280 + $0xe8] sm:$0xff]
        %v318 = vld [vmem:[%s280 + $0xf0] sm:$0xff]
        %v319 = vld [vmem:[%s280 + $0xf8] sm:$0xf]
        %v320 = vld [vmem:[%s280 + $0xfc] sm:$0xff]
        %v321 = vld [vmem:[%s280 + $0x104] sm:$0xff]
        %v322 = vld [vmem:[%s280 + $0x10c] sm:$0xff]
        %v323 = vld [vmem:[%s280 + $0x114] sm:$0xf]
        %v324 = vld [vmem:[%s280 + $0x118] sm:$0xff]
        %v325 = vld [vmem:[%s280 + $0x120] sm:$0xff]
        %v326 = vld [vmem:[%s280 + $0x128] sm:$0xff]
        %v327 = vld [vmem:[%s280 + $0x130] sm:$0xf]
        %v328 = vld [vmem:[%s280 + $0x134] sm:$0xff]
        %v329 = vld [vmem:[%s280 + $0x13c] sm:$0xff]
        %v330 = vld [vmem:[%s280 + $0x144] sm:$0xff]
        %v331 = vld [vmem:[%s280 + $0x14c] sm:$0xf]
        %v332 = vld [vmem:[%s280 + $0x150] sm:$0xff]
        %v333 = vld [vmem:[%s280 + $0x158] sm:$0xff]
        %v334 = vld [vmem:[%s280 + $0x160] sm:$0xff]
        %v335 = vld [vmem:[%s280 + $0x168] sm:$0xf]
        %v336 = vld [vmem:[%s280 + $0x16c] sm:$0xff]
        %v337 = vld [vmem:[%s280 + $0x174] sm:$0xff]
        %v338 = vld [vmem:[%s280 + $0x17c] sm:$0xff]
        %v339 = vld [vmem:[%s280 + $0x184] sm:$0xf]
        %v340 = vld [vmem:[%s280 + $0x188] sm:$0xff]
        %v341 = vld [vmem:[%s280 + $0x190] sm:$0xff]
        %v342 = vld [vmem:[%s280 + $0x198] sm:$0xff]
        %v343 = vld [vmem:[%s280 + $0x1a0] sm:$0xf]
        %v344 = vld [vmem:[%s280 + $0x1a4] sm:$0xff]
        %v345 = vld [vmem:[%s280 + $0x1ac] sm:$0xff]
        %v346 = vld [vmem:[%s280 + $0x1b4] sm:$0xff]
        %v347 = vld [vmem:[%s280 + $0x1bc] sm:$0xf]
        %v348 = vld [vmem:[%s280 + $0x1c0] sm:$0xff]
        %v349 = vld [vmem:[%s280 + $0x1c8] sm:$0xff]
        %v350 = vld [vmem:[%s280 + $0x1d0] sm:$0xff]
        %v351 = vld [vmem:[%s280 + $0x1d8] sm:$0xf]
        %v352 = vld [vmem:[%s280 + $0x1dc] sm:$0xff]
        %v353 = vld [vmem:[%s280 + $0x1e4] sm:$0xff]
        %v354 = vld [vmem:[%s280 + $0x1ec] sm:$0xff]
        %v355 = vld [vmem:[%s280 + $0x1f4] sm:$0xf]
        %v356 = vld [vmem:[%s280 + $0x1f8] sm:$0xff]
        %v357 = vld [vmem:[%s280 + $0x200] sm:$0xff]
        %v358 = vld [vmem:[%s280 + $0x208] sm:$0xff]
        %v359 = vld [vmem:[%s280 + $0x210] sm:$0xf]
        %v360 = vld [vmem:[%s280 + $0x214] sm:$0xff]
        %v361 = vld [vmem:[%s280 + $0x21c] sm:$0xff]
        %v362 = vld [vmem:[%s280 + $0x224] sm:$0xff]
        %v363 = vld [vmem:[%s280 + $0x22c] sm:$0xf]
        %v364 = vld [vmem:[%s280 + $0x230] sm:$0xff]
        %v365 = vld [vmem:[%s280 + $0x238] sm:$0xff]
        %v366 = vld [vmem:[%s280 + $0x240] sm:$0xff]
        %v367 = vld [vmem:[%s280 + $0x248] sm:$0xf]
        %v368 = vld [vmem:[%s280 + $0x24c] sm:$0xff]
        %v369 = vld [vmem:[%s280 + $0x254] sm:$0xff]
        %v370 = vld [vmem:[%s280 + $0x25c] sm:$0xff]
        %v371 = vld [vmem:[%s280 + $0x264] sm:$0xf]
        %v372 = vld [vmem:[%s280 + $0x268] sm:$0xff]
        %v373 = vld [vmem:[%s280 + $0x270] sm:$0xff]
        %v374 = vld [vmem:[%s280 + $0x278] sm:$0xff]
        %v375 = vld [vmem:[%s280 + $0x280] sm:$0xf]
        %v376 = vld [vmem:[%s280 + $0x284] sm:$0xff]
        %v377 = vld [vmem:[%s280 + $0x28c] sm:$0xff]
        %v378 = vld [vmem:[%s280 + $0x294] sm:$0xff]
        %v379 = vld [vmem:[%s280 + $0x29c] sm:$0xf]
        %v380 = vld [vmem:[%s280 + $0x2a0] sm:$0xff]
        %v381 = vld [vmem:[%s280 + $0x2a8] sm:$0xff]
        %v382 = vld [vmem:[%s280 + $0x2b0] sm:$0xff]
        %v383 = vld [vmem:[%s280 + $0x2b8] sm:$0xf]
        %v384 = vld [vmem:[%s280 + $0x2bc] sm:$0xff]
        %v385 = vld [vmem:[%s280 + $0x2c4] sm:$0xff]
        %v386 = vld [vmem:[%s280 + $0x2cc] sm:$0xff]
        %v387 = vld [vmem:[%s280 + $0x2d4] sm:$0xf]
        %v388 = vld [vmem:[%s280 + $0x2d8] sm:$0xff]
        %v389 = vld [vmem:[%s280 + $0x2e0] sm:$0xff]
        %v390 = vld [vmem:[%s280 + $0x2e8] sm:$0xff]
        %v391 = vld [vmem:[%s280 + $0x2f0] sm:$0xf]
        %v392 = vld [vmem:[%s280 + $0x2f4] sm:$0xff]
        %v393 = vld [vmem:[%s280 + $0x2fc] sm:$0xff]
        %v394 = vld [vmem:[%s280 + $0x304] sm:$0xff]
        %v395 = vld [vmem:[%s280 + $0x30c] sm:$0xf]
        %v396 = vld [vmem:[%s280 + $0x310] sm:$0xff]
        %v397 = vld [vmem:[%s280 + $0x318] sm:$0xff]
        %v398 = vld [vmem:[%s280 + $0x320] sm:$0xff]
        %v399 = vld [vmem:[%s280 + $0x328] sm:$0xf]
        %v400 = vld [vmem:[%s280 + $0x32c] sm:$0xff]
        %v401 = vld [vmem:[%s280 + $0x334] sm:$0xff]
        %v402 = vld [vmem:[%s280 + $0x33c] sm:$0xff]
        %v403 = vld [vmem:[%s280 + $0x344] sm:$0xf]
        %v404 = vld [vmem:[%s280 + $0x348] sm:$0xff]
        %v405 = vld [vmem:[%s280 + $0x350] sm:$0xff]
        %v406 = vld [vmem:[%s280 + $0x358] sm:$0xff]
        %v407 = vld [vmem:[%s280 + $0x360] sm:$0xf]
        %v408 = vld [vmem:[%s280 + $0x364] sm:$0xff]
        %v409 = vld [vmem:[%s280 + $0x36c] sm:$0xff]
        %v410 = vld [vmem:[%s280 + $0x374] sm:$0xff]
        %v411 = vld [vmem:[%s280 + $0x37c] sm:$0xf]
        %v412 = vld [vmem:[%s1] sm:$0xff]
        %v413 = vld [vmem:[%s1 + $0x8] sm:$0xff]
        %v414 = vld [vmem:[%s1 + $0x10] sm:$0xff]
        %v415 = vld [vmem:[%s1 + $0x18] sm:$0xff]
        %v416 = vld [vmem:[%s1 + $0x20] sm:$0xff]
        %v417 = vld [vmem:[%s1 + $0x28] sm:$0xff]
        %v418 = vld [vmem:[%s1 + $0x30] sm:$0xff]
        %v419 = vld [vmem:[%s1 + $0x38] sm:$0xff]
        %v420 = vld [vmem:[%s1 + $0x40] sm:$0xff]
        %v421 = vld [vmem:[%s1 + $0x48] sm:$0xff]
        %v422 = vld [vmem:[%s1 + $0x50] sm:$0xff]
        %v423 = vld [vmem:[%s1 + $0x58] sm:$0xff]
        %v424 = vld [vmem:[%s1 + $0x60] sm:$0xff]
        %v425 = vld [vmem:[%s1 + $0x68] sm:$0xff]
        %v426 = vld [vmem:[%s1 + $0x70] sm:$0xff]
        %v427 = vld [vmem:[%s1 + $0x78] sm:$0xff]
        %v428 = vld [vmem:[%s1 + $0x80] sm:$0xff]
        %v429 = vld [vmem:[%s1 + $0x88] sm:$0xff]
        %v430 = vld [vmem:[%s1 + $0x90] sm:$0xff]
        %v431 = vld [vmem:[%s1 + $0x98] sm:$0xff]
        %v432 = vld [vmem:[%s1 + $0xa0] sm:$0xff]
        %v433 = vld [vmem:[%s1 + $0xa8] sm:$0xff]
        %v434 = vld [vmem:[%s1 + $0xb0] sm:$0xff]
        %v435 = vld [vmem:[%s1 + $0xb8] sm:$0xff]
        %v436 = vld [vmem:[%s1 + $0xc0] sm:$0xff]
        %v437 = vld [vmem:[%s1 + $0xc8] sm:$0xff]
        %v438 = vld [vmem:[%s1 + $0xd0] sm:$0xff]
        %v439 = vld [vmem:[%s1 + $0xd8] sm:$0xff]
        %v440 = vld [vmem:[%s1 + $0xe0] sm:$0xff]
        %v441 = vld [vmem:[%s1 + $0xe8] sm:$0xff]
        %v442 = vld [vmem:[%s1 + $0xf0] sm:$0xff]
        %v443 = vld [vmem:[%s1 + $0xf8] sm:$0xff]
        %v444 = vld [vmem:[%s1 + $0x100] sm:$0xff]
        %v445 = vld [vmem:[%s1 + $0x108] sm:$0xff]
        %v446 = vld [vmem:[%s1 + $0x110] sm:$0xff]
        %v447 = vld [vmem:[%s1 + $0x118] sm:$0xff]
        %v448 = vld [vmem:[%s1 + $0x120] sm:$0xff]
        %v449 = vld [vmem:[%s1 + $0x128] sm:$0xff]
        %v450 = vld [vmem:[%s1 + $0x130] sm:$0xff]
        %v451 = vld [vmem:[%s1 + $0x138] sm:$0xff]
        %v452 = vld [vmem:[%s1 + $0x140] sm:$0xff]
        %v453 = vld [vmem:[%s1 + $0x148] sm:$0xff]
        %v454 = vld [vmem:[%s1 + $0x150] sm:$0xff]
        %v455 = vld [vmem:[%s1 + $0x158] sm:$0xff]
        %v456 = vld [vmem:[%s1 + $0x160] sm:$0xff]
        %v457 = vld [vmem:[%s1 + $0x168] sm:$0xff]
        %v458 = vld [vmem:[%s1 + $0x170] sm:$0xff]
        %v459 = vld [vmem:[%s1 + $0x178] sm:$0xff]
        %v460 = vld [vmem:[%s1 + $0x180] sm:$0xff]
        %v461 = vld [vmem:[%s1 + $0x188] sm:$0xff]
        %v462 = vld [vmem:[%s1 + $0x190] sm:$0xff]
        %v463 = vld [vmem:[%s1 + $0x198] sm:$0xff]
        %v464 = vld [vmem:[%s1 + $0x1a0] sm:$0xff]
        %v465 = vld [vmem:[%s1 + $0x1a8] sm:$0xff]
        %v466 = vld [vmem:[%s1 + $0x1b0] sm:$0xff]
        %v467 = vld [vmem:[%s1 + $0x1b8] sm:$0xff]
        %v468 = vld [vmem:[%s1 + $0x1c0] sm:$0xff]
        %v469 = vld [vmem:[%s1 + $0x1c8] sm:$0xff]
        %v470 = vld [vmem:[%s1 + $0x1d0] sm:$0xff]
        %v471 = vld [vmem:[%s1 + $0x1d8] sm:$0xff]
        %v472 = vld [vmem:[%s1 + $0x1e0] sm:$0xff]
        %v473 = vld [vmem:[%s1 + $0x1e8] sm:$0xff]
        %v474 = vld [vmem:[%s1 + $0x1f0] sm:$0xff]
        %v475 = vld [vmem:[%s1 + $0x1f8] sm:$0xff]
        %v476 = vld [vmem:[%s1 + $0x200] sm:$0xff]
        %v477 = vld [vmem:[%s1 + $0x208] sm:$0xff]
        %v478 = vld [vmem:[%s1 + $0x210] sm:$0xff]
        %v479 = vld [vmem:[%s1 + $0x218] sm:$0xff]
        %v480 = vld [vmem:[%s1 + $0x220] sm:$0xff]
        %v481 = vld [vmem:[%s1 + $0x228] sm:$0xff]
        %v482 = vld [vmem:[%s1 + $0x230] sm:$0xff]
        %v483 = vld [vmem:[%s1 + $0x238] sm:$0xff]
        %v484 = vld [vmem:[%s1 + $0x240] sm:$0xff]
        %v485 = vld [vmem:[%s1 + $0x248] sm:$0xff]
        %v486 = vld [vmem:[%s1 + $0x250] sm:$0xff]
        %v487 = vld [vmem:[%s1 + $0x258] sm:$0xff]
        %v488 = vld [vmem:[%s1 + $0x260] sm:$0xff]
        %v489 = vld [vmem:[%s1 + $0x268] sm:$0xff]
        %v490 = vld [vmem:[%s1 + $0x270] sm:$0xff]
        %v491 = vld [vmem:[%s1 + $0x278] sm:$0xff]
        %v492 = vld [vmem:[%s1 + $0x280] sm:$0xff]
        %v493 = vld [vmem:[%s1 + $0x288] sm:$0xff]
        %v494 = vld [vmem:[%s1 + $0x290] sm:$0xff]
        %v495 = vld [vmem:[%s1 + $0x298] sm:$0xff]
        %v496 = vld [vmem:[%s1 + $0x2a0] sm:$0xff]
        %v497 = vld [vmem:[%s1 + $0x2a8] sm:$0xff]
        %v498 = vld [vmem:[%s1 + $0x2b0] sm:$0xff]
        %v499 = vld [vmem:[%s1 + $0x2b8] sm:$0xff]
        %v500 = vld [vmem:[%s1 + $0x2c0] sm:$0xff]
        %v501 = vld [vmem:[%s1 + $0x2c8] sm:$0xff]
        %v502 = vld [vmem:[%s1 + $0x2d0] sm:$0xff]
        %v503 = vld [vmem:[%s1 + $0x2d8] sm:$0xff]
        %v504 = vld [vmem:[%s1 + $0x2e0] sm:$0xff]
        %v505 = vld [vmem:[%s1 + $0x2e8] sm:$0xff]
        %v506 = vld [vmem:[%s1 + $0x2f0] sm:$0xff]
        %v507 = vld [vmem:[%s1 + $0x2f8] sm:$0xff]
        %v508 = vld [vmem:[%s1 + $0x300] sm:$0xff]
        %v509 = vld [vmem:[%s1 + $0x308] sm:$0xff]
        %v510 = vld [vmem:[%s2] sm:$0x3]
        %v512 = vlaneseq
        %v513 = vshrl.u32 %v512, 7
        %v514 = vsub.s32 0, %v513
        %v515 = vrot.slane %v510, %v514
        %v516 = vlaneseq
        %v517 = vshrl.u32 %v516, 7
        %v518 = vsub.s32 1, %v517
        %v519 = vrot.slane %v510, %v518
        %v650 = vunpack.c.l.b16 %v284
        %v651 = vunpack.c.h.b16 %v284
        %v652 = vunpack.c.l.b16 %v285
        %v653 = vunpack.c.h.b16 %v285
        %v654 = vunpack.c.l.b16 %v286
        %v655 = vunpack.c.h.b16 %v286
        %v656 = vunpack.c.l.b16 %v287
        %v657 = vunpack.c.l.b16 %v288
        %v658 = vunpack.c.h.b16 %v288
        %v659 = vunpack.c.l.b16 %v289
        %v660 = vunpack.c.h.b16 %v289
        %v661 = vunpack.c.l.b16 %v290
        %v662 = vunpack.c.h.b16 %v290
        %v663 = vunpack.c.l.b16 %v291
        %v664 = vunpack.c.l.b16 %v292
        %v665 = vunpack.c.h.b16 %v292
        %v666 = vunpack.c.l.b16 %v293
        %v667 = vunpack.c.h.b16 %v293
        %v668 = vunpack.c.l.b16 %v294
        %v669 = vunpack.c.h.b16 %v294
        %v670 = vunpack.c.l.b16 %v295
        %v671 = vunpack.c.l.b16 %v296
        %v672 = vunpack.c.h.b16 %v296
        %v673 = vunpack.c.l.b16 %v297
        %v674 = vunpack.c.h.b16 %v297
        %v675 = vunpack.c.l.b16 %v298
        %v676 = vunpack.c.h.b16 %v298
        %v677 = vunpack.c.l.b16 %v299
        %v678 = vunpack.c.l.b16 %v300
        %v679 = vunpack.c.h.b16 %v300
        %v680 = vunpack.c.l.b16 %v301
        %v681 = vunpack.c.h.b16 %v301
        %v682 = vunpack.c.l.b16 %v302
        %v683 = vunpack.c.h.b16 %v302
        %v684 = vunpack.c.l.b16 %v303
        %v685 = vunpack.c.l.b16 %v304
        %v686 = vunpack.c.h.b16 %v304
        %v687 = vunpack.c.l.b16 %v305
        %v688 = vunpack.c.h.b16 %v305
        %v689 = vunpack.c.l.b16 %v306
        %v690 = vunpack.c.h.b16 %v306
        %v691 = vunpack.c.l.b16 %v307
        %v692 = vunpack.c.l.b16 %v308
        %v693 = vunpack.c.h.b16 %v308
        %v694 = vunpack.c.l.b16 %v309
        %v695 = vunpack.c.h.b16 %v309
        %v696 = vunpack.c.l.b16 %v310
        %v697 = vunpack.c.h.b16 %v310
        %v698 = vunpack.c.l.b16 %v311
        %v699 = vunpack.c.l.b16 %v312
        %v700 = vunpack.c.h.b16 %v312
        %v701 = vunpack.c.l.b16 %v313
        %v702 = vunpack.c.h.b16 %v313
        %v703 = vunpack.c.l.b16 %v314
        %v704 = vunpack.c.h.b16 %v314
        %v705 = vunpack.c.l.b16 %v315
        %v706 = vunpack.c.l.b16 %v316
        %v707 = vunpack.c.h.b16 %v316
        %v708 = vunpack.c.l.b16 %v317
        %v709 = vunpack.c.h.b16 %v317
        %v710 = vunpack.c.l.b16 %v318
        %v711 = vunpack.c.h.b16 %v318
        %v712 = vunpack.c.l.b16 %v319
        %v713 = vunpack.c.l.b16 %v320
        %v714 = vunpack.c.h.b16 %v320
        %v715 = vunpack.c.l.b16 %v321
        %v716 = vunpack.c.h.b16 %v321
        %v717 = vunpack.c.l.b16 %v322
        %v718 = vunpack.c.h.b16 %v322
        %v719 = vunpack.c.l.b16 %v323
        %v720 = vunpack.c.l.b16 %v324
        %v721 = vunpack.c.h.b16 %v324
        %v722 = vunpack.c.l.b16 %v325
        %v723 = vunpack.c.h.b16 %v325
        %v724 = vunpack.c.l.b16 %v326
        %v725 = vunpack.c.h.b16 %v326
        %v726 = vunpack.c.l.b16 %v327
        %v727 = vunpack.c.l.b16 %v328
        %v728 = vunpack.c.h.b16 %v328
        %v729 = vunpack.c.l.b16 %v329
        %v730 = vunpack.c.h.b16 %v329
        %v731 = vunpack.c.l.b16 %v330
        %v732 = vunpack.c.h.b16 %v330
        %v733 = vunpack.c.l.b16 %v331
        %v734 = vunpack.c.l.b16 %v332
        %v735 = vunpack.c.h.b16 %v332
        %v736 = vunpack.c.l.b16 %v333
        %v737 = vunpack.c.h.b16 %v333
        %v738 = vunpack.c.l.b16 %v334
        %v739 = vunpack.c.h.b16 %v334
        %v740 = vunpack.c.l.b16 %v335
        %v741 = vunpack.c.l.b16 %v336
        %v742 = vunpack.c.h.b16 %v336
        %v743 = vunpack.c.l.b16 %v337
        %v744 = vunpack.c.h.b16 %v337
        %v745 = vunpack.c.l.b16 %v338
        %v746 = vunpack.c.h.b16 %v338
        %v747 = vunpack.c.l.b16 %v339
        %v748 = vunpack.c.l.b16 %v340
        %v749 = vunpack.c.h.b16 %v340
        %v750 = vunpack.c.l.b16 %v341
        %v751 = vunpack.c.h.b16 %v341
        %v752 = vunpack.c.l.b16 %v342
        %v753 = vunpack.c.h.b16 %v342
        %v754 = vunpack.c.l.b16 %v343
        %v755 = vunpack.c.l.b16 %v344
        %v756 = vunpack.c.h.b16 %v344
        %v757 = vunpack.c.l.b16 %v345
        %v758 = vunpack.c.h.b16 %v345
        %v759 = vunpack.c.l.b16 %v346
        %v760 = vunpack.c.h.b16 %v346
        %v761 = vunpack.c.l.b16 %v347
        %v762 = vunpack.c.l.b16 %v348
        %v763 = vunpack.c.h.b16 %v348
        %v764 = vunpack.c.l.b16 %v349
        %v765 = vunpack.c.h.b16 %v349
        %v766 = vunpack.c.l.b16 %v350
        %v767 = vunpack.c.h.b16 %v350
        %v768 = vunpack.c.l.b16 %v351
        %v769 = vunpack.c.l.b16 %v352
        %v770 = vunpack.c.h.b16 %v352
        %v771 = vunpack.c.l.b16 %v353
        %v772 = vunpack.c.h.b16 %v353
        %v773 = vunpack.c.l.b16 %v354
        %v774 = vunpack.c.h.b16 %v354
        %v775 = vunpack.c.l.b16 %v355
        %v776 = vunpack.c.l.b16 %v356
        %v777 = vunpack.c.h.b16 %v356
        %v778 = vunpack.c.l.b16 %v357
        %v779 = vunpack.c.h.b16 %v357
        %v780 = vunpack.c.l.b16 %v358
        %v781 = vunpack.c.h.b16 %v358
        %v782 = vunpack.c.l.b16 %v359
        %v783 = vunpack.c.l.b16 %v360
        %v784 = vunpack.c.h.b16 %v360
        %v785 = vunpack.c.l.b16 %v361
        %v786 = vunpack.c.h.b16 %v361
        %v787 = vunpack.c.l.b16 %v362
        %v788 = vunpack.c.h.b16 %v362
        %v789 = vunpack.c.l.b16 %v363
        %v790 = vunpack.c.l.b16 %v364
        %v791 = vunpack.c.h.b16 %v364
        %v792 = vunpack.c.l.b16 %v365
        %v793 = vunpack.c.h.b16 %v365
        %v794 = vunpack.c.l.b16 %v366
        %v795 = vunpack.c.h.b16 %v366
        %v796 = vunpack.c.l.b16 %v367
        %v797 = vunpack.c.l.b16 %v368
        %v798 = vunpack.c.h.b16 %v368
        %v799 = vunpack.c.l.b16 %v369
        %v800 = vunpack.c.h.b16 %v369
        %v801 = vunpack.c.l.b16 %v370
        %v802 = vunpack.c.h.b16 %v370
        %v803 = vunpack.c.l.b16 %v371
        %v804 = vunpack.c.l.b16 %v372
        %v805 = vunpack.c.h.b16 %v372
        %v806 = vunpack.c.l.b16 %v373
        %v807 = vunpack.c.h.b16 %v373
        %v808 = vunpack.c.l.b16 %v374
        %v809 = vunpack.c.h.b16 %v374
        %v810 = vunpack.c.l.b16 %v375
        %v811 = vunpack.c.l.b16 %v376
        %v812 = vunpack.c.h.b16 %v376
        %v813 = vunpack.c.l.b16 %v377
        %v814 = vunpack.c.h.b16 %v377
        %v815 = vunpack.c.l.b16 %v378
        %v816 = vunpack.c.h.b16 %v378
        %v817 = vunpack.c.l.b16 %v379
        %v818 = vunpack.c.l.b16 %v380
        %v819 = vunpack.c.h.b16 %v380
        %v820 = vunpack.c.l.b16 %v381
        %v821 = vunpack.c.h.b16 %v381
        %v822 = vunpack.c.l.b16 %v382
        %v823 = vunpack.c.h.b16 %v382
        %v824 = vunpack.c.l.b16 %v383
        %v825 = vunpack.c.l.b16 %v384
        %v826 = vunpack.c.h.b16 %v384
        %v827 = vunpack.c.l.b16 %v385
        %v828 = vunpack.c.h.b16 %v385
        %v829 = vunpack.c.l.b16 %v386
        %v830 = vunpack.c.h.b16 %v386
        %v831 = vunpack.c.l.b16 %v387
        %v832 = vunpack.c.l.b16 %v388
        %v833 = vunpack.c.h.b16 %v388
        %v834 = vunpack.c.l.b16 %v389
        %v835 = vunpack.c.h.b16 %v389
        %v836 = vunpack.c.l.b16 %v390
        %v837 = vunpack.c.h.b16 %v390
        %v838 = vunpack.c.l.b16 %v391
        %v839 = vunpack.c.l.b16 %v392
        %v840 = vunpack.c.h.b16 %v392
        %v841 = vunpack.c.l.b16 %v393
        %v842 = vunpack.c.h.b16 %v393
        %v843 = vunpack.c.l.b16 %v394
        %v844 = vunpack.c.h.b16 %v394
        %v845 = vunpack.c.l.b16 %v395
        %v846 = vunpack.c.l.b16 %v396
        %v847 = vunpack.c.h.b16 %v396
        %v848 = vunpack.c.l.b16 %v397
        %v849 = vunpack.c.h.b16 %v397
        %v850 = vunpack.c.l.b16 %v398
        %v851 = vunpack.c.h.b16 %v398
        %v852 = vunpack.c.l.b16 %v399
        %v853 = vunpack.c.l.b16 %v400
        %v854 = vunpack.c.h.b16 %v400
        %v855 = vunpack.c.l.b16 %v401
        %v856 = vunpack.c.h.b16 %v401
        %v857 = vunpack.c.l.b16 %v402
        %v858 = vunpack.c.h.b16 %v402
        %v859 = vunpack.c.l.b16 %v403
        %v860 = vunpack.c.l.b16 %v404
        %v861 = vunpack.c.h.b16 %v404
        %v862 = vunpack.c.l.b16 %v405
        %v863 = vunpack.c.h.b16 %v405
        %v864 = vunpack.c.l.b16 %v406
        %v865 = vunpack.c.h.b16 %v406
        %v866 = vunpack.c.l.b16 %v407
        %v867 = vunpack.c.l.b16 %v408
        %v868 = vunpack.c.h.b16 %v408
        %v869 = vunpack.c.l.b16 %v409
        %v870 = vunpack.c.h.b16 %v409
        %v871 = vunpack.c.l.b16 %v410
        %v872 = vunpack.c.h.b16 %v410
        %v873 = vunpack.c.l.b16 %v411
        %v874 = vpack.c.b16 %v657, %v650
        %v875 = vpack.c.b16 %v658, %v651
        %v876 = vpack.c.b16 %v659, %v652
        %v877 = vpack.c.b16 %v660, %v653
        %v878 = vpack.c.b16 %v661, %v654
        %v879 = vpack.c.b16 %v662, %v655
        %v880 = vpack.c.b16 %v663, %v656
        %v881 = vpack.c.b16 %v671, %v664
        %v882 = vpack.c.b16 %v672, %v665
        %v883 = vpack.c.b16 %v673, %v666
        %v884 = vpack.c.b16 %v674, %v667
        %v885 = vpack.c.b16 %v675, %v668
        %v886 = vpack.c.b16 %v676, %v669
        %v887 = vpack.c.b16 %v677, %v670
        %v888 = vpack.c.b16 %v685, %v678
        %v889 = vpack.c.b16 %v686, %v679
        %v890 = vpack.c.b16 %v687, %v680
        %v891 = vpack.c.b16 %v688, %v681
        %v892 = vpack.c.b16 %v689, %v682
        %v893 = vpack.c.b16 %v690, %v683
        %v894 = vpack.c.b16 %v691, %v684
        %v895 = vpack.c.b16 %v699, %v692
        %v896 = vpack.c.b16 %v700, %v693
        %v897 = vpack.c.b16 %v701, %v694
        %v898 = vpack.c.b16 %v702, %v695
        %v899 = vpack.c.b16 %v703, %v696
        %v900 = vpack.c.b16 %v704, %v697
        %v901 = vpack.c.b16 %v705, %v698
        %v902 = vpack.c.b16 %v713, %v706
        %v903 = vpack.c.b16 %v714, %v707
        %v904 = vpack.c.b16 %v715, %v708
        %v905 = vpack.c.b16 %v716, %v709
        %v906 = vpack.c.b16 %v717, %v710
        %v907 = vpack.c.b16 %v718, %v711
        %v908 = vpack.c.b16 %v719, %v712
        %v909 = vpack.c.b16 %v727, %v720
        %v910 = vpack.c.b16 %v728, %v721
        %v911 = vpack.c.b16 %v729, %v722
        %v912 = vpack.c.b16 %v730, %v723
        %v913 = vpack.c.b16 %v731, %v724
        %v914 = vpack.c.b16 %v732, %v725
        %v915 = vpack.c.b16 %v733, %v726
        %v916 = vpack.c.b16 %v741, %v734
        %v917 = vpack.c.b16 %v742, %v735
        %v918 = vpack.c.b16 %v743, %v736
        %v919 = vpack.c.b16 %v744, %v737
        %v920 = vpack.c.b16 %v745, %v738
        %v921 = vpack.c.b16 %v746, %v739
        %v922 = vpack.c.b16 %v747, %v740
        %v923 = vpack.c.b16 %v755, %v748
        %v924 = vpack.c.b16 %v756, %v749
        %v925 = vpack.c.b16 %v757, %v750
        %v926 = vpack.c.b16 %v758, %v751
        %v927 = vpack.c.b16 %v759, %v752
        %v928 = vpack.c.b16 %v760, %v753
        %v929 = vpack.c.b16 %v761, %v754
        %v930 = vpack.c.b16 %v769, %v762
        %v931 = vpack.c.b16 %v770, %v763
        %v932 = vpack.c.b16 %v771, %v764
        %v933 = vpack.c.b16 %v772, %v765
        %v934 = vpack.c.b16 %v773, %v766
        %v935 = vpack.c.b16 %v774, %v767
        %v936 = vpack.c.b16 %v775, %v768
        %v937 = vpack.c.b16 %v783, %v776
        %v938 = vpack.c.b16 %v784, %v777
        %v939 = vpack.c.b16 %v785, %v778
        %v940 = vpack.c.b16 %v786, %v779
        %v941 = vpack.c.b16 %v787, %v780
        %v942 = vpack.c.b16 %v788, %v781
        %v943 = vpack.c.b16 %v789, %v782
        %v944 = vpack.c.b16 %v797, %v790
        %v945 = vpack.c.b16 %v798, %v791
        %v946 = vpack.c.b16 %v799, %v792
        %v947 = vpack.c.b16 %v800, %v793
        %v948 = vpack.c.b16 %v801, %v794
        %v949 = vpack.c.b16 %v802, %v795
        %v950 = vpack.c.b16 %v803, %v796
        %v951 = vpack.c.b16 %v811, %v804
        %v952 = vpack.c.b16 %v812, %v805
        %v953 = vpack.c.b16 %v813, %v806
        %v954 = vpack.c.b16 %v814, %v807
        %v955 = vpack.c.b16 %v815, %v808
        %v956 = vpack.c.b16 %v816, %v809
        %v957 = vpack.c.b16 %v817, %v810
        %v958 = vpack.c.b16 %v825, %v818
        %v959 = vpack.c.b16 %v826, %v819
        %v960 = vpack.c.b16 %v827, %v820
        %v961 = vpack.c.b16 %v828, %v821
        %v962 = vpack.c.b16 %v829, %v822
        %v963 = vpack.c.b16 %v830, %v823
        %v964 = vpack.c.b16 %v831, %v824
        %v965 = vpack.c.b16 %v839, %v832
        %v966 = vpack.c.b16 %v840, %v833
        %v967 = vpack.c.b16 %v841, %v834
        %v968 = vpack.c.b16 %v842, %v835
        %v969 = vpack.c.b16 %v843, %v836
        %v970 = vpack.c.b16 %v844, %v837
        %v971 = vpack.c.b16 %v845, %v838
        %v972 = vpack.c.b16 %v853, %v846
        %v973 = vpack.c.b16 %v854, %v847
        %v974 = vpack.c.b16 %v855, %v848
        %v975 = vpack.c.b16 %v856, %v849
        %v976 = vpack.c.b16 %v857, %v850
        %v977 = vpack.c.b16 %v858, %v851
        %v978 = vpack.c.b16 %v859, %v852
        %v979 = vpack.c.b16 %v867, %v860
        %v980 = vpack.c.b16 %v868, %v861
        %v981 = vpack.c.b16 %v869, %v862
        %v982 = vpack.c.b16 %v870, %v863
        %v983 = vpack.c.b16 %v871, %v864
        %v984 = vpack.c.b16 %v872, %v865
        %v985 = vpack.c.b16 %v873, %v866
        %v1180 = vunpack.c.l.b16 %v412
        %v1181 = vunpack.c.h.b16 %v412
        %v1182 = vunpack.c.l.b16 %v413
        %v1183 = vunpack.c.h.b16 %v413
        %v1184 = vunpack.c.l.b16 %v414
        %v1185 = vunpack.c.h.b16 %v414
        %v1186 = vunpack.c.l.b16 %v415
        %v1187 = vunpack.c.h.b16 %v415
        %v1188 = vunpack.c.l.b16 %v416
        %v1189 = vunpack.c.h.b16 %v416
        %v1190 = vunpack.c.l.b16 %v417
        %v1191 = vunpack.c.h.b16 %v417
        %v1192 = vunpack.c.l.b16 %v418
        %v1193 = vunpack.c.h.b16 %v418
        %v1194 = vunpack.c.l.b16 %v419
        %v1195 = vunpack.c.h.b16 %v419
        %v1196 = vunpack.c.l.b16 %v420
        %v1197 = vunpack.c.h.b16 %v420
        %v1198 = vunpack.c.l.b16 %v421
        %v1199 = vunpack.c.h.b16 %v421
        %v1200 = vunpack.c.l.b16 %v422
        %v1201 = vunpack.c.h.b16 %v422
        %v1202 = vunpack.c.l.b16 %v423
        %v1203 = vunpack.c.h.b16 %v423
        %v1204 = vunpack.c.l.b16 %v424
        %v1205 = vunpack.c.h.b16 %v424
        %v1206 = vunpack.c.l.b16 %v425
        %v1207 = vunpack.c.h.b16 %v425
        %v1208 = vunpack.c.l.b16 %v426
        %v1209 = vunpack.c.h.b16 %v426
        %v1210 = vunpack.c.l.b16 %v427
        %v1211 = vunpack.c.h.b16 %v427
        %v1212 = vunpack.c.l.b16 %v428
        %v1213 = vunpack.c.h.b16 %v428
        %v1214 = vunpack.c.l.b16 %v429
        %v1215 = vunpack.c.h.b16 %v429
        %v1216 = vunpack.c.l.b16 %v430
        %v1217 = vunpack.c.h.b16 %v430
        %v1218 = vunpack.c.l.b16 %v431
        %v1219 = vunpack.c.h.b16 %v431
        %v1220 = vunpack.c.l.b16 %v432
        %v1221 = vunpack.c.h.b16 %v432
        %v1222 = vunpack.c.l.b16 %v433
        %v1223 = vunpack.c.h.b16 %v433
        %v1224 = vunpack.c.l.b16 %v434
        %v1225 = vunpack.c.h.b16 %v434
        %v1226 = vunpack.c.l.b16 %v435
        %v1227 = vunpack.c.h.b16 %v435
        %v1228 = vunpack.c.l.b16 %v436
        %v1229 = vunpack.c.h.b16 %v436
        %v1230 = vunpack.c.l.b16 %v437
        %v1231 = vunpack.c.h.b16 %v437
        %v1232 = vunpack.c.l.b16 %v438
        %v1233 = vunpack.c.h.b16 %v438
        %v1234 = vunpack.c.l.b16 %v439
        %v1235 = vunpack.c.h.b16 %v439
        %v1236 = vunpack.c.l.b16 %v440
        %v1237 = vunpack.c.h.b16 %v440
        %v1238 = vunpack.c.l.b16 %v441
        %v1239 = vunpack.c.h.b16 %v441
        %v1240 = vunpack.c.l.b16 %v442
        %v1241 = vunpack.c.h.b16 %v442
        %v1242 = vunpack.c.l.b16 %v443
        %v1243 = vunpack.c.h.b16 %v443
        %v1244 = vunpack.c.l.b16 %v444
        %v1245 = vunpack.c.h.b16 %v444
        %v1246 = vunpack.c.l.b16 %v445
        %v1247 = vunpack.c.h.b16 %v445
        %v1248 = vunpack.c.l.b16 %v446
        %v1249 = vunpack.c.h.b16 %v446
        %v1250 = vunpack.c.l.b16 %v447
        %v1251 = vunpack.c.h.b16 %v447
        %v1252 = vunpack.c.l.b16 %v448
        %v1253 = vunpack.c.h.b16 %v448
        %v1254 = vunpack.c.l.b16 %v449
        %v1255 = vunpack.c.h.b16 %v449
        %v1256 = vunpack.c.l.b16 %v450
        %v1257 = vunpack.c.h.b16 %v450
        %v1258 = vunpack.c.l.b16 %v451
        %v1259 = vunpack.c.h.b16 %v451
        %v1260 = vunpack.c.l.b16 %v452
        %v1261 = vunpack.c.h.b16 %v452
        %v1262 = vunpack.c.l.b16 %v453
        %v1263 = vunpack.c.h.b16 %v453
        %v1264 = vunpack.c.l.b16 %v454
        %v1265 = vunpack.c.h.b16 %v454
        %v1266 = vunpack.c.l.b16 %v455
        %v1267 = vunpack.c.h.b16 %v455
        %v1268 = vunpack.c.l.b16 %v456
        %v1269 = vunpack.c.h.b16 %v456
        %v1270 = vunpack.c.l.b16 %v457
        %v1271 = vunpack.c.h.b16 %v457
        %v1272 = vunpack.c.l.b16 %v458
        %v1273 = vunpack.c.h.b16 %v458
        %v1274 = vunpack.c.l.b16 %v459
        %v1275 = vunpack.c.h.b16 %v459
        %v1276 = vunpack.c.l.b16 %v460
        %v1277 = vunpack.c.h.b16 %v460
        %v1278 = vunpack.c.l.b16 %v461
        %v1279 = vunpack.c.h.b16 %v461
        %v1280 = vunpack.c.l.b16 %v462
        %v1281 = vunpack.c.h.b16 %v462
        %v1282 = vunpack.c.l.b16 %v463
        %v1283 = vunpack.c.h.b16 %v463
        %v1284 = vunpack.c.l.b16 %v464
        %v1285 = vunpack.c.h.b16 %v464
        %v1286 = vunpack.c.l.b16 %v465
        %v1287 = vunpack.c.h.b16 %v465
        %v1288 = vunpack.c.l.b16 %v466
        %v1289 = vunpack.c.h.b16 %v466
        %v1290 = vunpack.c.l.b16 %v467
        %v1291 = vunpack.c.h.b16 %v467
        %v1292 = vunpack.c.l.b16 %v468
        %v1293 = vunpack.c.h.b16 %v468
        %v1294 = vunpack.c.l.b16 %v469
        %v1295 = vunpack.c.h.b16 %v469
        %v1296 = vunpack.c.l.b16 %v470
        %v1297 = vunpack.c.h.b16 %v470
        %v1298 = vunpack.c.l.b16 %v471
        %v1299 = vunpack.c.h.b16 %v471
        %v1300 = vunpack.c.l.b16 %v472
        %v1301 = vunpack.c.h.b16 %v472
        %v1302 = vunpack.c.l.b16 %v473
        %v1303 = vunpack.c.h.b16 %v473
        %v1304 = vunpack.c.l.b16 %v474
        %v1305 = vunpack.c.h.b16 %v474
        %v1306 = vunpack.c.l.b16 %v475
        %v1307 = vunpack.c.h.b16 %v475
        %v1308 = vunpack.c.l.b16 %v476
        %v1309 = vunpack.c.h.b16 %v476
        %v1310 = vunpack.c.l.b16 %v477
        %v1311 = vunpack.c.h.b16 %v477
        %v1312 = vunpack.c.l.b16 %v478
        %v1313 = vunpack.c.h.b16 %v478
        %v1314 = vunpack.c.l.b16 %v479
        %v1315 = vunpack.c.h.b16 %v479
        %v1316 = vunpack.c.l.b16 %v480
        %v1317 = vunpack.c.h.b16 %v480
        %v1318 = vunpack.c.l.b16 %v481
        %v1319 = vunpack.c.h.b16 %v481
        %v1320 = vunpack.c.l.b16 %v482
        %v1321 = vunpack.c.h.b16 %v482
        %v1322 = vunpack.c.l.b16 %v483
        %v1323 = vunpack.c.h.b16 %v483
        %v1324 = vunpack.c.l.b16 %v484
        %v1325 = vunpack.c.h.b16 %v484
        %v1326 = vunpack.c.l.b16 %v485
        %v1327 = vunpack.c.h.b16 %v485
        %v1328 = vunpack.c.l.b16 %v486
        %v1329 = vunpack.c.h.b16 %v486
        %v1330 = vunpack.c.l.b16 %v487
        %v1331 = vunpack.c.h.b16 %v487
        %v1332 = vunpack.c.l.b16 %v488
        %v1333 = vunpack.c.h.b16 %v488
        %v1334 = vunpack.c.l.b16 %v489
        %v1335 = vunpack.c.h.b16 %v489
        %v1336 = vunpack.c.l.b16 %v490
        %v1337 = vunpack.c.h.b16 %v490
        %v1338 = vunpack.c.l.b16 %v491
        %v1339 = vunpack.c.h.b16 %v491
        %v1340 = vunpack.c.l.b16 %v492
        %v1341 = vunpack.c.h.b16 %v492
        %v1342 = vunpack.c.l.b16 %v493
        %v1343 = vunpack.c.h.b16 %v493
        %v1344 = vunpack.c.l.b16 %v494
        %v1345 = vunpack.c.h.b16 %v494
        %v1346 = vunpack.c.l.b16 %v495
        %v1347 = vunpack.c.h.b16 %v495
        %v1348 = vunpack.c.l.b16 %v496
        %v1349 = vunpack.c.h.b16 %v496
        %v1350 = vunpack.c.l.b16 %v497
        %v1351 = vunpack.c.h.b16 %v497
        %v1352 = vunpack.c.l.b16 %v498
        %v1353 = vunpack.c.h.b16 %v498
        %v1354 = vunpack.c.l.b16 %v499
        %v1355 = vunpack.c.h.b16 %v499
        %v1356 = vunpack.c.l.b16 %v500
        %v1357 = vunpack.c.h.b16 %v500
        %v1358 = vunpack.c.l.b16 %v501
        %v1359 = vunpack.c.h.b16 %v501
        %v1360 = vunpack.c.l.b16 %v502
        %v1361 = vunpack.c.h.b16 %v502
        %v1362 = vunpack.c.l.b16 %v503
        %v1363 = vunpack.c.h.b16 %v503
        %v1364 = vunpack.c.l.b16 %v504
        %v1365 = vunpack.c.h.b16 %v504
        %v1366 = vunpack.c.l.b16 %v505
        %v1367 = vunpack.c.h.b16 %v505
        %v1368 = vunpack.c.l.b16 %v506
        %v1369 = vunpack.c.h.b16 %v506
        %v1370 = vunpack.c.l.b16 %v507
        %v1371 = vunpack.c.h.b16 %v507
        %v1372 = vunpack.c.l.b16 %v508
        %v1373 = vunpack.c.h.b16 %v508
        %v1374 = vunpack.c.l.b16 %v509
        %v1375 = vunpack.c.h.b16 %v509
        %v1376 = vpack.c.b16 %v1182, %v1180
        %v1377 = vpack.c.b16 %v1183, %v1181
        %v1378 = vpack.c.b16 %v1186, %v1184
        %v1379 = vpack.c.b16 %v1187, %v1185
        %v1380 = vpack.c.b16 %v1190, %v1188
        %v1381 = vpack.c.b16 %v1191, %v1189
        %v1382 = vpack.c.b16 %v1194, %v1192
        %v1383 = vpack.c.b16 %v1195, %v1193
        %v1384 = vpack.c.b16 %v1198, %v1196
        %v1385 = vpack.c.b16 %v1199, %v1197
        %v1386 = vpack.c.b16 %v1202, %v1200
        %v1387 = vpack.c.b16 %v1203, %v1201
        %v1388 = vpack.c.b16 %v1206, %v1204
        %v1389 = vpack.c.b16 %v1207, %v1205
        %v1390 = vpack.c.b16 %v1210, %v1208
        %v1391 = vpack.c.b16 %v1211, %v1209
        %v1392 = vpack.c.b16 %v1214, %v1212
        %v1393 = vpack.c.b16 %v1215, %v1213
        %v1394 = vpack.c.b16 %v1218, %v1216
        %v1395 = vpack.c.b16 %v1219, %v1217
        %v1396 = vpack.c.b16 %v1222, %v1220
        %v1397 = vpack.c.b16 %v1223, %v1221
        %v1398 = vpack.c.b16 %v1226, %v1224
        %v1399 = vpack.c.b16 %v1227, %v1225
        %v1400 = vpack.c.b16 %v1230, %v1228
        %v1401 = vpack.c.b16 %v1231, %v1229
        %v1402 = vpack.c.b16 %v1234, %v1232
        %v1403 = vpack.c.b16 %v1235, %v1233
        %v1404 = vpack.c.b16 %v1238, %v1236
        %v1405 = vpack.c.b16 %v1239, %v1237
        %v1406 = vpack.c.b16 %v1242, %v1240
        %v1407 = vpack.c.b16 %v1243, %v1241
        %v1408 = vpack.c.b16 %v1246, %v1244
        %v1409 = vpack.c.b16 %v1247, %v1245
        %v1410 = vpack.c.b16 %v1250, %v1248
        %v1411 = vpack.c.b16 %v1251, %v1249
        %v1412 = vpack.c.b16 %v1254, %v1252
        %v1413 = vpack.c.b16 %v1255, %v1253
        %v1414 = vpack.c.b16 %v1258, %v1256
        %v1415 = vpack.c.b16 %v1259, %v1257
        %v1416 = vpack.c.b16 %v1262, %v1260
        %v1417 = vpack.c.b16 %v1263, %v1261
        %v1418 = vpack.c.b16 %v1266, %v1264
        %v1419 = vpack.c.b16 %v1267, %v1265
        %v1420 = vpack.c.b16 %v1270, %v1268
        %v1421 = vpack.c.b16 %v1271, %v1269
        %v1422 = vpack.c.b16 %v1274, %v1272
        %v1423 = vpack.c.b16 %v1275, %v1273
        %v1424 = vpack.c.b16 %v1278, %v1276
        %v1425 = vpack.c.b16 %v1279, %v1277
        %v1426 = vpack.c.b16 %v1282, %v1280
        %v1427 = vpack.c.b16 %v1283, %v1281
        %v1428 = vpack.c.b16 %v1286, %v1284
        %v1429 = vpack.c.b16 %v1287, %v1285
        %v1430 = vpack.c.b16 %v1290, %v1288
        %v1431 = vpack.c.b16 %v1291, %v1289
        %v1432 = vpack.c.b16 %v1294, %v1292
        %v1433 = vpack.c.b16 %v1295, %v1293
        %v1434 = vpack.c.b16 %v1298, %v1296
        %v1435 = vpack.c.b16 %v1299, %v1297
        %v1436 = vpack.c.b16 %v1302, %v1300
        %v1437 = vpack.c.b16 %v1303, %v1301
        %v1438 = vpack.c.b16 %v1306, %v1304
        %v1439 = vpack.c.b16 %v1307, %v1305
        %v1440 = vpack.c.b16 %v1310, %v1308
        %v1441 = vpack.c.b16 %v1311, %v1309
        %v1442 = vpack.c.b16 %v1314, %v1312
        %v1443 = vpack.c.b16 %v1315, %v1313
        %v1444 = vpack.c.b16 %v1318, %v1316
        %v1445 = vpack.c.b16 %v1319, %v1317
        %v1446 = vpack.c.b16 %v1322, %v1320
        %v1447 = vpack.c.b16 %v1323, %v1321
        %v1448 = vpack.c.b16 %v1326, %v1324
        %v1449 = vpack.c.b16 %v1327, %v1325
        %v1450 = vpack.c.b16 %v1330, %v1328
        %v1451 = vpack.c.b16 %v1331, %v1329
        %v1452 = vpack.c.b16 %v1334, %v1332
        %v1453 = vpack.c.b16 %v1335, %v1333
        %v1454 = vpack.c.b16 %v1338, %v1336
        %v1455 = vpack.c.b16 %v1339, %v1337
        %v1456 = vpack.c.b16 %v1342, %v1340
        %v1457 = vpack.c.b16 %v1343, %v1341
        %v1458 = vpack.c.b16 %v1346, %v1344
        %v1459 = vpack.c.b16 %v1347, %v1345
        %v1460 = vpack.c.b16 %v1350, %v1348
        %v1461 = vpack.c.b16 %v1351, %v1349
        %v1462 = vpack.c.b16 %v1354, %v1352
        %v1463 = vpack.c.b16 %v1355, %v1353
        %v1464 = vpack.c.b16 %v1358, %v1356
        %v1465 = vpack.c.b16 %v1359, %v1357
        %v1466 = vpack.c.b16 %v1362, %v1360
        %v1467 = vpack.c.b16 %v1363, %v1361
        %v1468 = vpack.c.b16 %v1366, %v1364
        %v1469 = vpack.c.b16 %v1367, %v1365
        %v1470 = vpack.c.b16 %v1370, %v1368
        %v1471 = vpack.c.b16 %v1371, %v1369
        %v1472 = vpack.c.b16 %v1374, %v1372
        %v1473 = vpack.c.b16 %v1375, %v1373
        %vm1572 = vcmask 130048
        %v1574 = vsel %vm1572, %v880, 0
        %v1577 = vsel %vm1572, %v887, 0
        %v1580 = vsel %vm1572, %v894, 0
        %v1583 = vsel %vm1572, %v901, 0
        %v1586 = vsel %vm1572, %v908, 0
        %v1589 = vsel %vm1572, %v915, 0
        %v1592 = vsel %vm1572, %v922, 0
        %v1595 = vsel %vm1572, %v929, 0
        %v1598 = vsel %vm1572, %v936, 0
        %v1601 = vsel %vm1572, %v943, 0
        %v1604 = vsel %vm1572, %v950, 0
        %v1607 = vsel %vm1572, %v957, 0
        %v1610 = vsel %vm1572, %v964, 0
        %v1613 = vsel %vm1572, %v971, 0
        %v1616 = vsel %vm1572, %v978, 0
        %v1619 = vsel %vm1572, %v985, 0
        %1621 = vmatprep.subr.bf16.mxu0 %v1377
        %1622 = vmatpush1.bf16.msra.mxu0 %v1376
        %1623 = vmatprep.subr.bf16.mxu0 %v1379
        %1624 = vmatpush1.bf16.msra.mxu0 %v1378
        %1625 = vmatprep.subr.bf16.mxu0 %v1381
        %1626 = vmatpush1.bf16.msra.mxu0 %v1380
        %1627 = vmatprep.subr.bf16.mxu0 %v1383
        %1628 = vmatpush1.bf16.msra.mxu0 %v1382
        %1629 = vmatprep.subr.bf16.mxu0 %v1385
        %1630 = vmatpush1.bf16.msra.mxu0 %v1384
        %1631 = vmatprep.subr.bf16.mxu0 %v1387
        %1632 = vmatpush1.bf16.msra.mxu0 %v1386
        %1633 = vmatprep.subr.bf16.mxu0 %v1389
        %1634 = vmatpush1.bf16.msra.mxu0 %v1388
        %1635 = vmatprep.subr.bf16.mxu0 %v1391
        %1636 = vmatpush1.bf16.msra.mxu0 %v1390
        %1637 = vmatprep.subr.bf16.mxu0 %v1393
        %1638 = vmatpush1.bf16.msra.mxu0 %v1392
        %1639 = vmatprep.subr.bf16.mxu0 %v1395
        %1640 = vmatpush1.bf16.msra.mxu0 %v1394
        %1641 = vmatprep.subr.bf16.mxu0 %v1397
        %1642 = vmatpush1.bf16.msra.mxu0 %v1396
        %1643 = vmatprep.subr.bf16.mxu0 %v1399
        %1644 = vmatpush1.bf16.msra.mxu0 %v1398
        %1645 = vmatprep.subr.bf16.mxu0 %v1401
        %1646 = vmatpush1.bf16.msra.mxu0 %v1400
        %1647 = vmatprep.subr.bf16.mxu0 %v1403
        %1648 = vmatpush1.bf16.msra.mxu0 %v1402
        %1649 = vmatprep.subr.bf16.mxu0 %v1405
        %1650 = vmatpush1.bf16.msra.mxu0 %v1404
        %1651 = vmatprep.subr.bf16.mxu0 %v1407
        %1652 = vmatpush1.bf16.msra.mxu0 %v1406
        %1653 = vmatprep.mubr.bf16.mxu0 %v875
        %1654 = vmatmul.mubr.bf16.gmra.mrb[0].mxu0 %v874
        %v1655 = vpop.f32.mrb[0].mxu0
        %v1656 = vadd.f32 %v515, %v1655
        %v1657 = vpop.f32.mrb[0].mxu0
        %v1658 = vadd.f32 %v519, %v1657
        %v1659 = vpop.f32.mrb[0].mxu0
        %v1660 = vadd.f32 %v515, %v1659
        %v1661 = vpop.f32.mrb[0].mxu0
        %v1662 = vadd.f32 %v519, %v1661
        %1663 = vmatprep.mubr.bf16.mxu0 %v882
        %1664 = vmatmul.mubr.bf16.gmra.mrb[0].mxu0 %v881
        %v1665 = vpop.f32.mrb[0].mxu0
        %v1666 = vadd.f32 %v515, %v1665
        %v1667 = vpop.f32.mrb[0].mxu0
        %v1668 = vadd.f32 %v519, %v1667
        %v1669 = vpop.f32.mrb[0].mxu0
        %v1670 = vadd.f32 %v515, %v1669
        %v1671 = vpop.f32.mrb[0].mxu0
        %v1672 = vadd.f32 %v519, %v1671
        %1673 = vmatprep.mubr.bf16.mxu0 %v889
        %1674 = vmatmul.mubr.bf16.gmra.mrb[0].mxu0 %v888
        %v1675 = vpop.f32.mrb[0].mxu0
        %v1676 = vadd.f32 %v515, %v1675
        %v1677 = vpop.f32.mrb[0].mxu0
        %v1678 = vadd.f32 %v519, %v1677
        %v1679 = vpop.f32.mrb[0].mxu0
        %v1680 = vadd.f32 %v515, %v1679
        %v1681 = vpop.f32.mrb[0].mxu0
        %v1682 = vadd.f32 %v519, %v1681
        %1683 = vmatprep.mubr.bf16.mxu0 %v896
        %1684 = vmatmul.mubr.bf16.gmra.mrb[0].mxu0 %v895
        %v1685 = vpop.f32.mrb[0].mxu0
        %v1686 = vadd.f32 %v515, %v1685
        %v1687 = vpop.f32.mrb[0].mxu0
        %v1688 = vadd.f32 %v519, %v1687
        %v1689 = vpop.f32.mrb[0].mxu0
        %v1690 = vadd.f32 %v515, %v1689
        %v1691 = vpop.f32.mrb[0].mxu0
        %v1692 = vadd.f32 %v519, %v1691
        %1693 = vmatprep.mubr.bf16.mxu0 %v903
        %1694 = vmatmul.mubr.bf16.gmra.mrb[0].mxu0 %v902
        %v1695 = vpop.f32.mrb[0].mxu0
        %v1696 = vadd.f32 %v515, %v1695
        %v1697 = vpop.f32.mrb[0].mxu0
        %v1698 = vadd.f32 %v519, %v1697
        %v1699 = vpop.f32.mrb[0].mxu0
        %v1700 = vadd.f32 %v515, %v1699
        %v1701 = vpop.f32.mrb[0].mxu0
        %v1702 = vadd.f32 %v519, %v1701
        %1703 = vmatprep.mubr.bf16.mxu0 %v910
        %1704 = vmatmul.mubr.bf16.gmra.mrb[0].mxu0 %v909
        %v1705 = vpop.f32.mrb[0].mxu0
        %v1706 = vadd.f32 %v515, %v1705
        %v1707 = vpop.f32.mrb[0].mxu0
        %v1708 = vadd.f32 %v519, %v1707
        %v1709 = vpop.f32.mrb[0].mxu0
        %v1710 = vadd.f32 %v515, %v1709
        %v1711 = vpop.f32.mrb[0].mxu0
        %v1712 = vadd.f32 %v519, %v1711
        %1713 = vmatprep.mubr.bf16.mxu0 %v917
        %1714 = vmatmul.mubr.bf16.gmra.mrb[0].mxu0 %v916
        %v1715 = vpop.f32.mrb[0].mxu0
        %v1716 = vadd.f32 %v515, %v1715
        %v1717 = vpop.f32.mrb[0].mxu0
        %v1718 = vadd.f32 %v519, %v1717
        %v1719 = vpop.f32.mrb[0].mxu0
        %v1720 = vadd.f32 %v515, %v1719
        %v1721 = vpop.f32.mrb[0].mxu0
        %v1722 = vadd.f32 %v519, %v1721
        %1723 = vmatprep.mubr.bf16.mxu0 %v924
        %1724 = vmatmul.mubr.bf16.gmra.mrb[0].mxu0 %v923
        %v1725 = vpop.f32.mrb[0].mxu0
        %v1726 = vadd.f32 %v515, %v1725
        %v1727 = vpop.f32.mrb[0].mxu0
        %v1728 = vadd.f32 %v519, %v1727
        %v1729 = vpop.f32.mrb[0].mxu0
        %v1730 = vadd.f32 %v515, %v1729
        %v1731 = vpop.f32.mrb[0].mxu0
        %v1732 = vadd.f32 %v519, %v1731
        %1733 = vmatprep.mubr.bf16.mxu0 %v931
        %1734 = vmatmul.mubr.bf16.gmra.mrb[0].mxu0 %v930
        %v1735 = vpop.f32.mrb[0].mxu0
        %v1736 = vadd.f32 %v515, %v1735
        %v1737 = vpop.f32.mrb[0].mxu0
        %v1738 = vadd.f32 %v519, %v1737
        %v1739 = vpop.f32.mrb[0].mxu0
        %v1740 = vadd.f32 %v515, %v1739
        %v1741 = vpop.f32.mrb[0].mxu0
        %v1742 = vadd.f32 %v519, %v1741
        %1743 = vmatprep.mubr.bf16.mxu0 %v938
        %1744 = vmatmul.mubr.bf16.gmra.mrb[0].mxu0 %v937
        %v1745 = vpop.f32.mrb[0].mxu0
        %v1746 = vadd.f32 %v515, %v1745
        %v1747 = vpop.f32.mrb[0].mxu0
        %v1748 = vadd.f32 %v519, %v1747
        %v1749 = vpop.f32.mrb[0].mxu0
        %v1750 = vadd.f32 %v515, %v1749
        %v1751 = vpop.f32.mrb[0].mxu0
        %v1752 = vadd.f32 %v519, %v1751
        %1753 = vmatprep.mubr.bf16.mxu0 %v945
        %1754 = vmatmul.mubr.bf16.gmra.mrb[0].mxu0 %v944
        %v1755 = vpop.f32.mrb[0].mxu0
        %v1756 = vadd.f32 %v515, %v1755
        %v1757 = vpop.f32.mrb[0].mxu0
        %v1758 = vadd.f32 %v519, %v1757
        %v1759 = vpop.f32.mrb[0].mxu0
        %v1760 = vadd.f32 %v515, %v1759
        %v1761 = vpop.f32.mrb[0].mxu0
        %v1762 = vadd.f32 %v519, %v1761
        %1763 = vmatprep.mubr.bf16.mxu0 %v952
        %1764 = vmatmul.mubr.bf16.gmra.mrb[0].mxu0 %v951
        %v1765 = vpop.f32.mrb[0].mxu0
        %v1766 = vadd.f32 %v515, %v1765
        %v1767 = vpop.f32.mrb[0].mxu0
        %v1768 = vadd.f32 %v519, %v1767
        %v1769 = vpop.f32.mrb[0].mxu0
        %v1770 = vadd.f32 %v515, %v1769
        %v1771 = vpop.f32.mrb[0].mxu0
        %v1772 = vadd.f32 %v519, %v1771
        %1773 = vmatprep.mubr.bf16.mxu0 %v959
        %1774 = vmatmul.mubr.bf16.gmra.mrb[0].mxu0 %v958
        %v1775 = vpop.f32.mrb[0].mxu0
        %v1776 = vadd.f32 %v515, %v1775
        %v1777 = vpop.f32.mrb[0].mxu0
        %v1778 = vadd.f32 %v519, %v1777
        %v1779 = vpop.f32.mrb[0].mxu0
        %v1780 = vadd.f32 %v515, %v1779
        %v1781 = vpop.f32.mrb[0].mxu0
        %v1782 = vadd.f32 %v519, %v1781
        %1783 = vmatprep.mubr.bf16.mxu0 %v966
        %1784 = vmatmul.mubr.bf16.gmra.mrb[0].mxu0 %v965
        %v1785 = vpop.f32.mrb[0].mxu0
        %v1786 = vadd.f32 %v515, %v1785
        %v1787 = vpop.f32.mrb[0].mxu0
        %v1788 = vadd.f32 %v519, %v1787
        %v1789 = vpop.f32.mrb[0].mxu0
        %v1790 = vadd.f32 %v515, %v1789
        %v1791 = vpop.f32.mrb[0].mxu0
        %v1792 = vadd.f32 %v519, %v1791
        %1793 = vmatprep.mubr.bf16.mxu0 %v973
        %1794 = vmatmul.mubr.bf16.gmra.mrb[0].mxu0 %v972
        %v1795 = vpop.f32.mrb[0].mxu0
        %v1796 = vadd.f32 %v515, %v1795
        %v1797 = vpop.f32.mrb[0].mxu0
        %v1798 = vadd.f32 %v519, %v1797
        %v1799 = vpop.f32.mrb[0].mxu0
        %v1800 = vadd.f32 %v515, %v1799
        %v1801 = vpop.f32.mrb[0].mxu0
        %v1802 = vadd.f32 %v519, %v1801
        %1803 = vmatprep.mubr.bf16.mxu0 %v980
        %1804 = vmatmul.mubr.bf16.gmra.mrb[0].mxu0 %v979
        %v1805 = vpop.f32.mrb[0].mxu0
        %v1806 = vadd.f32 %v515, %v1805
        %v1807 = vpop.f32.mrb[0].mxu0
        %v1808 = vadd.f32 %v519, %v1807
        %v1809 = vpop.f32.mrb[0].mxu0
        %v1810 = vadd.f32 %v515, %v1809
        %v1811 = vpop.f32.mrb[0].mxu0
        %v1812 = vadd.f32 %v519, %v1811
        %1813 = vdwg.mxu0
        %1814 = vmatprep.subr.bf16.mxu0 %v1409
        %1815 = vmatpush1.bf16.msra.mxu0 %v1408
        %1816 = vmatprep.subr.bf16.mxu0 %v1411
        %1817 = vmatpush1.bf16.msra.mxu0 %v1410
        %1818 = vmatprep.subr.bf16.mxu0 %v1413
        %1819 = vmatpush1.bf16.msra.mxu0 %v1412
        %1820 = vmatprep.subr.bf16.mxu0 %v1415
        %1821 = vmatpush1.bf16.msra.mxu0 %v1414
        %1822 = vmatprep.subr.bf16.mxu0 %v1417
        %1823 = vmatpush1.bf16.msra.mxu0 %v1416
        %1824 = vmatprep.subr.bf16.mxu0 %v1419
        %1825 = vmatpush1.bf16.msra.mxu0 %v1418
        %1826 = vmatprep.subr.bf16.mxu0 %v1421
        %1827 = vmatpush1.bf16.msra.mxu0 %v1420
        %1828 = vmatprep.subr.bf16.mxu0 %v1423
        %1829 = vmatpush1.bf16.msra.mxu0 %v1422
        %1830 = vmatprep.subr.bf16.mxu0 %v1425
        %1831 = vmatpush1.bf16.msra.mxu0 %v1424
        %1832 = vmatprep.subr.bf16.mxu0 %v1427
        %1833 = vmatpush1.bf16.msra.mxu0 %v1426
        %1834 = vmatprep.subr.bf16.mxu0 %v1429
        %1835 = vmatpush1.bf16.msra.mxu0 %v1428
        %1836 = vmatprep.subr.bf16.mxu0 %v1431
        %1837 = vmatpush1.bf16.msra.mxu0 %v1430
        %1838 = vmatprep.subr.bf16.mxu0 %v1433
        %1839 = vmatpush1.bf16.msra.mxu0 %v1432
        %1840 = vmatprep.subr.bf16.mxu0 %v1435
        %1841 = vmatpush1.bf16.msra.mxu0 %v1434
        %1842 = vmatprep.subr.bf16.mxu0 %v1437
        %1843 = vmatpush1.bf16.msra.mxu0 %v1436
        %1844 = vmatprep.subr.bf16.mxu0 %v1439
        %1845 = vmatpush1.bf16.msra.mxu0 %v1438
        %1846 = vmatprep.mubr.bf16.mxu0 %v877
        %1847 = vmatmul.mubr.bf16.gmra.mrb[0].mxu0 %v876
        %v1848 = vpop.f32.mrb[0].mxu0
        %v1849 = vadd.f32 %v1656, %v1848
        %v1850 = vpop.f32.mrb[0].mxu0
        %v1851 = vadd.f32 %v1658, %v1850
        %v1852 = vpop.f32.mrb[0].mxu0
        %v1853 = vadd.f32 %v1660, %v1852
        %v1854 = vpop.f32.mrb[0].mxu0
        %v1855 = vadd.f32 %v1662, %v1854
        %1856 = vmatprep.mubr.bf16.mxu0 %v884
        %1857 = vmatmul.mubr.bf16.gmra.mrb[0].mxu0 %v883
        %v1858 = vpop.f32.mrb[0].mxu0
        %v1859 = vadd.f32 %v1666, %v1858
        %v1860 = vpop.f32.mrb[0].mxu0
        %v1861 = vadd.f32 %v1668, %v1860
        %v1862 = vpop.f32.mrb[0].mxu0
        %v1863 = vadd.f32 %v1670, %v1862
        %v1864 = vpop.f32.mrb[0].mxu0
        %v1865 = vadd.f32 %v1672, %v1864
        %1866 = vmatprep.mubr.bf16.mxu0 %v891
        %1867 = vmatmul.mubr.bf16.gmra.mrb[0].mxu0 %v890
        %v1868 = vpop.f32.mrb[0].mxu0
        %v1869 = vadd.f32 %v1676, %v1868
        %v1870 = vpop.f32.mrb[0].mxu0
        %v1871 = vadd.f32 %v1678, %v1870
        %v1872 = vpop.f32.mrb[0].mxu0
        %v1873 = vadd.f32 %v1680, %v1872
        %v1874 = vpop.f32.mrb[0].mxu0
        %v1875 = vadd.f32 %v1682, %v1874
        %1876 = vmatprep.mubr.bf16.mxu0 %v898
        %1877 = vmatmul.mubr.bf16.gmra.mrb[0].mxu0 %v897
        %v1878 = vpop.f32.mrb[0].mxu0
        %v1879 = vadd.f32 %v1686, %v1878
        %v1880 = vpop.f32.mrb[0].mxu0
        %v1881 = vadd.f32 %v1688, %v1880
        %v1882 = vpop.f32.mrb[0].mxu0
        %v1883 = vadd.f32 %v1690, %v1882
        %v1884 = vpop.f32.mrb[0].mxu0
        %v1885 = vadd.f32 %v1692, %v1884
        %1886 = vmatprep.mubr.bf16.mxu0 %v905
        %1887 = vmatmul.mubr.bf16.gmra.mrb[0].mxu0 %v904
        %v1888 = vpop.f32.mrb[0].mxu0
        %v1889 = vadd.f32 %v1696, %v1888
        %v1890 = vpop.f32.mrb[0].mxu0
        %v1891 = vadd.f32 %v1698, %v1890
        %v1892 = vpop.f32.mrb[0].mxu0
        %v1893 = vadd.f32 %v1700, %v1892
        %v1894 = vpop.f32.mrb[0].mxu0
        %v1895 = vadd.f32 %v1702, %v1894
        %1896 = vmatprep.mubr.bf16.mxu0 %v912
        %1897 = vmatmul.mubr.bf16.gmra.mrb[0].mxu0 %v911
        %v1898 = vpop.f32.mrb[0].mxu0
        %v1899 = vadd.f32 %v1706, %v1898
        %v1900 = vpop.f32.mrb[0].mxu0
        %v1901 = vadd.f32 %v1708, %v1900
        %v1902 = vpop.f32.mrb[0].mxu0
        %v1903 = vadd.f32 %v1710, %v1902
        %v1904 = vpop.f32.mrb[0].mxu0
        %v1905 = vadd.f32 %v1712, %v1904
        %1906 = vmatprep.mubr.bf16.mxu0 %v919
        %1907 = vmatmul.mubr.bf16.gmra.mrb[0].mxu0 %v918
        %v1908 = vpop.f32.mrb[0].mxu0
        %v1909 = vadd.f32 %v1716, %v1908
        %v1910 = vpop.f32.mrb[0].mxu0
        %v1911 = vadd.f32 %v1718, %v1910
        %v1912 = vpop.f32.mrb[0].mxu0
        %v1913 = vadd.f32 %v1720, %v1912
        %v1914 = vpop.f32.mrb[0].mxu0
        %v1915 = vadd.f32 %v1722, %v1914
        %1916 = vmatprep.mubr.bf16.mxu0 %v926
        %1917 = vmatmul.mubr.bf16.gmra.mrb[0].mxu0 %v925
        %v1918 = vpop.f32.mrb[0].mxu0
        %v1919 = vadd.f32 %v1726, %v1918
        %v1920 = vpop.f32.mrb[0].mxu0
        %v1921 = vadd.f32 %v1728, %v1920
        %v1922 = vpop.f32.mrb[0].mxu0
        %v1923 = vadd.f32 %v1730, %v1922
        %v1924 = vpop.f32.mrb[0].mxu0
        %v1925 = vadd.f32 %v1732, %v1924
        %1926 = vmatprep.mubr.bf16.mxu0 %v933
        %1927 = vmatmul.mubr.bf16.gmra.mrb[0].mxu0 %v932
        %v1928 = vpop.f32.mrb[0].mxu0
        %v1929 = vadd.f32 %v1736, %v1928
        %v1930 = vpop.f32.mrb[0].mxu0
        %v1931 = vadd.f32 %v1738, %v1930
        %v1932 = vpop.f32.mrb[0].mxu0
        %v1933 = vadd.f32 %v1740, %v1932
        %v1934 = vpop.f32.mrb[0].mxu0
        %v1935 = vadd.f32 %v1742, %v1934
        %1936 = vmatprep.mubr.bf16.mxu0 %v940
        %1937 = vmatmul.mubr.bf16.gmra.mrb[0].mxu0 %v939
        %v1938 = vpop.f32.mrb[0].mxu0
        %v1939 = vadd.f32 %v1746, %v1938
        %v1940 = vpop.f32.mrb[0].mxu0
        %v1941 = vadd.f32 %v1748, %v1940
        %v1942 = vpop.f32.mrb[0].mxu0
        %v1943 = vadd.f32 %v1750, %v1942
        %v1944 = vpop.f32.mrb[0].mxu0
        %v1945 = vadd.f32 %v1752, %v1944
        %1946 = vmatprep.mubr.bf16.mxu0 %v947
        %1947 = vmatmul.mubr.bf16.gmra.mrb[0].mxu0 %v946
        %v1948 = vpop.f32.mrb[0].mxu0
        %v1949 = vadd.f32 %v1756, %v1948
        %v1950 = vpop.f32.mrb[0].mxu0
        %v1951 = vadd.f32 %v1758, %v1950
        %v1952 = vpop.f32.mrb[0].mxu0
        %v1953 = vadd.f32 %v1760, %v1952
        %v1954 = vpop.f32.mrb[0].mxu0
        %v1955 = vadd.f32 %v1762, %v1954
        %1956 = vmatprep.mubr.bf16.mxu0 %v954
        %1957 = vmatmul.mubr.bf16.gmra.mrb[0].mxu0 %v953
        %v1958 = vpop.f32.mrb[0].mxu0
        %v1959 = vadd.f32 %v1766, %v1958
        %v1960 = vpop.f32.mrb[0].mxu0
        %v1961 = vadd.f32 %v1768, %v1960
        %v1962 = vpop.f32.mrb[0].mxu0
        %v1963 = vadd.f32 %v1770, %v1962
        %v1964 = vpop.f32.mrb[0].mxu0
        %v1965 = vadd.f32 %v1772, %v1964
        %1966 = vmatprep.mubr.bf16.mxu0 %v961
        %1967 = vmatmul.mubr.bf16.gmra.mrb[0].mxu0 %v960
        %v1968 = vpop.f32.mrb[0].mxu0
        %v1969 = vadd.f32 %v1776, %v1968
        %v1970 = vpop.f32.mrb[0].mxu0
        %v1971 = vadd.f32 %v1778, %v1970
        %v1972 = vpop.f32.mrb[0].mxu0
        %v1973 = vadd.f32 %v1780, %v1972
        %v1974 = vpop.f32.mrb[0].mxu0
        %v1975 = vadd.f32 %v1782, %v1974
        %1976 = vmatprep.mubr.bf16.mxu0 %v968
        %1977 = vmatmul.mubr.bf16.gmra.mrb[0].mxu0 %v967
        %v1978 = vpop.f32.mrb[0].mxu0
        %v1979 = vadd.f32 %v1786, %v1978
        %v1980 = vpop.f32.mrb[0].mxu0
        %v1981 = vadd.f32 %v1788, %v1980
        %v1982 = vpop.f32.mrb[0].mxu0
        %v1983 = vadd.f32 %v1790, %v1982
        %v1984 = vpop.f32.mrb[0].mxu0
        %v1985 = vadd.f32 %v1792, %v1984
        %1986 = vmatprep.mubr.bf16.mxu0 %v975
        %1987 = vmatmul.mubr.bf16.gmra.mrb[0].mxu0 %v974
        %v1988 = vpop.f32.mrb[0].mxu0
        %v1989 = vadd.f32 %v1796, %v1988
        %v1990 = vpop.f32.mrb[0].mxu0
        %v1991 = vadd.f32 %v1798, %v1990
        %v1992 = vpop.f32.mrb[0].mxu0
        %v1993 = vadd.f32 %v1800, %v1992
        %v1994 = vpop.f32.mrb[0].mxu0
        %v1995 = vadd.f32 %v1802, %v1994
        %1996 = vmatprep.mubr.bf16.mxu0 %v982
        %1997 = vmatmul.mubr.bf16.gmra.mrb[0].mxu0 %v981
        %v1998 = vpop.f32.mrb[0].mxu0
        %v1999 = vadd.f32 %v1806, %v1998
        %v2000 = vpop.f32.mrb[0].mxu0
        %v2001 = vadd.f32 %v1808, %v2000
        %v2002 = vpop.f32.mrb[0].mxu0
        %v2003 = vadd.f32 %v1810, %v2002
        %v2004 = vpop.f32.mrb[0].mxu0
        %v2005 = vadd.f32 %v1812, %v2004
        %2006 = vdwg.mxu0
        %2007 = vmatprep.subr.bf16.mxu0 %v1441
        %2008 = vmatpush1.bf16.msra.mxu0 %v1440
        %2009 = vmatprep.subr.bf16.mxu0 %v1443
        %2010 = vmatpush1.bf16.msra.mxu0 %v1442
        %2011 = vmatprep.subr.bf16.mxu0 %v1445
        %2012 = vmatpush1.bf16.msra.mxu0 %v1444
        %2013 = vmatprep.subr.bf16.mxu0 %v1447
        %2014 = vmatpush1.bf16.msra.mxu0 %v1446
        %2015 = vmatprep.subr.bf16.mxu0 %v1449
        %2016 = vmatpush1.bf16.msra.mxu0 %v1448
        %2017 = vmatprep.subr.bf16.mxu0 %v1451
        %2018 = vmatpush1.bf16.msra.mxu0 %v1450
        %2019 = vmatprep.subr.bf16.mxu0 %v1453
        %2020 = vmatpush1.bf16.msra.mxu0 %v1452
        %2021 = vmatprep.subr.bf16.mxu0 %v1455
        %2022 = vmatpush1.bf16.msra.mxu0 %v1454
        %2023 = vmatprep.subr.bf16.mxu0 %v1457
        %2024 = vmatpush1.bf16.msra.mxu0 %v1456
        %2025 = vmatprep.subr.bf16.mxu0 %v1459
        %2026 = vmatpush1.bf16.msra.mxu0 %v1458
        %2027 = vmatprep.subr.bf16.mxu0 %v1461
        %2028 = vmatpush1.bf16.msra.mxu0 %v1460
        %2029 = vmatprep.subr.bf16.mxu0 %v1463
        %2030 = vmatpush1.bf16.msra.mxu0 %v1462
        %2031 = vmatprep.subr.bf16.mxu0 %v1465
        %2032 = vmatpush1.bf16.msra.mxu0 %v1464
        %2033 = vmatprep.subr.bf16.mxu0 %v1467
        %2034 = vmatpush1.bf16.msra.mxu0 %v1466
        %2035 = vmatprep.subr.bf16.mxu0 %v1469
        %2036 = vmatpush1.bf16.msra.mxu0 %v1468
        %2037 = vmatprep.subr.bf16.mxu0 %v1471
        %2038 = vmatpush1.bf16.msra.mxu0 %v1470
        %2039 = vmatprep.mubr.bf16.mxu0 %v879
        %2040 = vmatmul.mubr.bf16.gmra.mrb[0].mxu0 %v878
        %v2041 = vpop.f32.mrb[0].mxu0
        %v2042 = vadd.f32 %v1849, %v2041
        %v2043 = vpop.f32.mrb[0].mxu0
        %v2044 = vadd.f32 %v1851, %v2043
        %v2045 = vpop.f32.mrb[0].mxu0
        %v2046 = vadd.f32 %v1853, %v2045
        %v2047 = vpop.f32.mrb[0].mxu0
        %v2048 = vadd.f32 %v1855, %v2047
        %2049 = vmatprep.mubr.bf16.mxu0 %v886
        %2050 = vmatmul.mubr.bf16.gmra.mrb[0].mxu0 %v885
        %v2051 = vpop.f32.mrb[0].mxu0
        %v2052 = vadd.f32 %v1859, %v2051
        %v2053 = vpop.f32.mrb[0].mxu0
        %v2054 = vadd.f32 %v1861, %v2053
        %v2055 = vpop.f32.mrb[0].mxu0
        %v2056 = vadd.f32 %v1863, %v2055
        %v2057 = vpop.f32.mrb[0].mxu0
        %v2058 = vadd.f32 %v1865, %v2057
        %2059 = vmatprep.mubr.bf16.mxu0 %v893
        %2060 = vmatmul.mubr.bf16.gmra.mrb[0].mxu0 %v892
        %v2061 = vpop.f32.mrb[0].mxu0
        %v2062 = vadd.f32 %v1869, %v2061
        %v2063 = vpop.f32.mrb[0].mxu0
        %v2064 = vadd.f32 %v1871, %v2063
        %v2065 = vpop.f32.mrb[0].mxu0
        %v2066 = vadd.f32 %v1873, %v2065
        %v2067 = vpop.f32.mrb[0].mxu0
        %v2068 = vadd.f32 %v1875, %v2067
        %2069 = vmatprep.mubr.bf16.mxu0 %v900
        %2070 = vmatmul.mubr.bf16.gmra.mrb[0].mxu0 %v899
        %v2071 = vpop.f32.mrb[0].mxu0
        %v2072 = vadd.f32 %v1879, %v2071
        %v2073 = vpop.f32.mrb[0].mxu0
        %v2074 = vadd.f32 %v1881, %v2073
        %v2075 = vpop.f32.mrb[0].mxu0
        %v2076 = vadd.f32 %v1883, %v2075
        %v2077 = vpop.f32.mrb[0].mxu0
        %v2078 = vadd.f32 %v1885, %v2077
        %2079 = vmatprep.mubr.bf16.mxu0 %v907
        %2080 = vmatmul.mubr.bf16.gmra.mrb[0].mxu0 %v906
        %v2081 = vpop.f32.mrb[0].mxu0
        %v2082 = vadd.f32 %v1889, %v2081
        %v2083 = vpop.f32.mrb[0].mxu0
        %v2084 = vadd.f32 %v1891, %v2083
        %v2085 = vpop.f32.mrb[0].mxu0
        %v2086 = vadd.f32 %v1893, %v2085
        %v2087 = vpop.f32.mrb[0].mxu0
        %v2088 = vadd.f32 %v1895, %v2087
        %2089 = vmatprep.mubr.bf16.mxu0 %v914
        %2090 = vmatmul.mubr.bf16.gmra.mrb[0].mxu0 %v913
        %v2091 = vpop.f32.mrb[0].mxu0
        %v2092 = vadd.f32 %v1899, %v2091
        %v2093 = vpop.f32.mrb[0].mxu0
        %v2094 = vadd.f32 %v1901, %v2093
        %v2095 = vpop.f32.mrb[0].mxu0
        %v2096 = vadd.f32 %v1903, %v2095
        %v2097 = vpop.f32.mrb[0].mxu0
        %v2098 = vadd.f32 %v1905, %v2097
        %2099 = vmatprep.mubr.bf16.mxu0 %v921
        %2100 = vmatmul.mubr.bf16.gmra.mrb[0].mxu0 %v920
        %v2101 = vpop.f32.mrb[0].mxu0
        %v2102 = vadd.f32 %v1909, %v2101
        %v2103 = vpop.f32.mrb[0].mxu0
        %v2104 = vadd.f32 %v1911, %v2103
        %v2105 = vpop.f32.mrb[0].mxu0
        %v2106 = vadd.f32 %v1913, %v2105
        %v2107 = vpop.f32.mrb[0].mxu0
        %v2108 = vadd.f32 %v1915, %v2107
        %2109 = vmatprep.mubr.bf16.mxu0 %v928
        %2110 = vmatmul.mubr.bf16.gmra.mrb[0].mxu0 %v927
        %v2111 = vpop.f32.mrb[0].mxu0
        %v2112 = vadd.f32 %v1919, %v2111
        %v2113 = vpop.f32.mrb[0].mxu0
        %v2114 = vadd.f32 %v1921, %v2113
        %v2115 = vpop.f32.mrb[0].mxu0
        %v2116 = vadd.f32 %v1923, %v2115
        %v2117 = vpop.f32.mrb[0].mxu0
        %v2118 = vadd.f32 %v1925, %v2117
        %2119 = vmatprep.mubr.bf16.mxu0 %v935
        %2120 = vmatmul.mubr.bf16.gmra.mrb[0].mxu0 %v934
        %v2121 = vpop.f32.mrb[0].mxu0
        %v2122 = vadd.f32 %v1929, %v2121
        %v2123 = vpop.f32.mrb[0].mxu0
        %v2124 = vadd.f32 %v1931, %v2123
        %v2125 = vpop.f32.mrb[0].mxu0
        %v2126 = vadd.f32 %v1933, %v2125
        %v2127 = vpop.f32.mrb[0].mxu0
        %v2128 = vadd.f32 %v1935, %v2127
        %2129 = vmatprep.mubr.bf16.mxu0 %v942
        %2130 = vmatmul.mubr.bf16.gmra.mrb[0].mxu0 %v941
        %v2131 = vpop.f32.mrb[0].mxu0
        %v2132 = vadd.f32 %v1939, %v2131
        %v2133 = vpop.f32.mrb[0].mxu0
        %v2134 = vadd.f32 %v1941, %v2133
        %v2135 = vpop.f32.mrb[0].mxu0
        %v2136 = vadd.f32 %v1943, %v2135
        %v2137 = vpop.f32.mrb[0].mxu0
        %v2138 = vadd.f32 %v1945, %v2137
        %2139 = vmatprep.mubr.bf16.mxu0 %v949
        %2140 = vmatmul.mubr.bf16.gmra.mrb[0].mxu0 %v948
        %v2141 = vpop.f32.mrb[0].mxu0
        %v2142 = vadd.f32 %v1949, %v2141
        %v2143 = vpop.f32.mrb[0].mxu0
        %v2144 = vadd.f32 %v1951, %v2143
        %v2145 = vpop.f32.mrb[0].mxu0
        %v2146 = vadd.f32 %v1953, %v2145
        %v2147 = vpop.f32.mrb[0].mxu0
        %v2148 = vadd.f32 %v1955, %v2147
        %2149 = vmatprep.mubr.bf16.mxu0 %v956
        %2150 = vmatmul.mubr.bf16.gmra.mrb[0].mxu0 %v955
        %v2151 = vpop.f32.mrb[0].mxu0
        %v2152 = vadd.f32 %v1959, %v2151
        %v2153 = vpop.f32.mrb[0].mxu0
        %v2154 = vadd.f32 %v1961, %v2153
        %v2155 = vpop.f32.mrb[0].mxu0
        %v2156 = vadd.f32 %v1963, %v2155
        %v2157 = vpop.f32.mrb[0].mxu0
        %v2158 = vadd.f32 %v1965, %v2157
        %2159 = vmatprep.mubr.bf16.mxu0 %v963
        %2160 = vmatmul.mubr.bf16.gmra.mrb[0].mxu0 %v962
        %v2161 = vpop.f32.mrb[0].mxu0
        %v2162 = vadd.f32 %v1969, %v2161
        %v2163 = vpop.f32.mrb[0].mxu0
        %v2164 = vadd.f32 %v1971, %v2163
        %v2165 = vpop.f32.mrb[0].mxu0
        %v2166 = vadd.f32 %v1973, %v2165
        %v2167 = vpop.f32.mrb[0].mxu0
        %v2168 = vadd.f32 %v1975, %v2167
        %2169 = vmatprep.mubr.bf16.mxu0 %v970
        %2170 = vmatmul.mubr.bf16.gmra.mrb[0].mxu0 %v969
        %v2171 = vpop.f32.mrb[0].mxu0
        %v2172 = vadd.f32 %v1979, %v2171
        %v2173 = vpop.f32.mrb[0].mxu0
        %v2174 = vadd.f32 %v1981, %v2173
        %v2175 = vpop.f32.mrb[0].mxu0
        %v2176 = vadd.f32 %v1983, %v2175
        %v2177 = vpop.f32.mrb[0].mxu0
        %v2178 = vadd.f32 %v1985, %v2177
        %2179 = vmatprep.mubr.bf16.mxu0 %v977
        %2180 = vmatmul.mubr.bf16.gmra.mrb[0].mxu0 %v976
        %v2181 = vpop.f32.mrb[0].mxu0
        %v2182 = vadd.f32 %v1989, %v2181
        %v2183 = vpop.f32.mrb[0].mxu0
        %v2184 = vadd.f32 %v1991, %v2183
        %v2185 = vpop.f32.mrb[0].mxu0
        %v2186 = vadd.f32 %v1993, %v2185
        %v2187 = vpop.f32.mrb[0].mxu0
        %v2188 = vadd.f32 %v1995, %v2187
        %2189 = vmatprep.mubr.bf16.mxu0 %v984
        %2190 = vmatmul.mubr.bf16.gmra.mrb[0].mxu0 %v983
        %v2191 = vpop.f32.mrb[0].mxu0
        %v2192 = vadd.f32 %v1999, %v2191
        %v2193 = vpop.f32.mrb[0].mxu0
        %v2194 = vadd.f32 %v2001, %v2193
        %v2195 = vpop.f32.mrb[0].mxu0
        %v2196 = vadd.f32 %v2003, %v2195
        %v2197 = vpop.f32.mrb[0].mxu0
        %v2198 = vadd.f32 %v2005, %v2197
        %2199 = vdwg.mxu0
        %2200 = vmatprep.subr.bf16.mxu0 %v1473
        %2201 = vmatpush1.bf16.msra.mxu0 %v1472
        %2202 = vmatprep.subr.bf16.mxu0 0
        %2203 = vmatpush1.bf16.msra.mxu0 0
        %2204 = vmatprep.subr.bf16.mxu0 0
        %2205 = vmatpush1.bf16.msra.mxu0 0
        %2206 = vmatprep.subr.bf16.mxu0 0
        %2207 = vmatpush1.bf16.msra.mxu0 0
        %2208 = vmatprep.subr.bf16.mxu0 0
        %2209 = vmatpush1.bf16.msra.mxu0 0
        %2210 = vmatprep.subr.bf16.mxu0 0
        %2211 = vmatpush1.bf16.msra.mxu0 0
        %2212 = vmatprep.subr.bf16.mxu0 0
        %2213 = vmatpush1.bf16.msra.mxu0 0
        %2214 = vmatprep.subr.bf16.mxu0 0
        %2215 = vmatpush1.bf16.msra.mxu0 0
        %2216 = vmatprep.subr.bf16.mxu0 0
        %2217 = vmatpush1.bf16.msra.mxu0 0
        %2218 = vmatprep.subr.bf16.mxu0 0
        %2219 = vmatpush1.bf16.msra.mxu0 0
        %2220 = vmatprep.subr.bf16.mxu0 0
        %2221 = vmatpush1.bf16.msra.mxu0 0
        %2222 = vmatprep.subr.bf16.mxu0 0
        %2223 = vmatpush1.bf16.msra.mxu0 0
        %2224 = vmatprep.subr.bf16.mxu0 0
        %2225 = vmatpush1.bf16.msra.mxu0 0
        %2226 = vmatprep.subr.bf16.mxu0 0
        %2227 = vmatpush1.bf16.msra.mxu0 0
        %2228 = vmatprep.subr.bf16.mxu0 0
        %2229 = vmatpush1.bf16.msra.mxu0 0
        %2230 = vmatprep.subr.bf16.mxu0 0
        %2231 = vmatpush1.bf16.msra.mxu0 0
        %2232 = vmatprep.mubr.bf16.mxu0 0
        %2233 = vmatmul.mubr.bf16.gmra.mrb[0].mxu0 %v1574
        %v2234 = vpop.f32.mrb[0].mxu0
        %v2235 = vadd.f32 %v2042, %v2234
        %v2236 = vpop.f32.mrb[0].mxu0
        %v2237 = vadd.f32 %v2044, %v2236
        %v2238 = vpop.f32.mrb[0].mxu0
        %v2239 = vadd.f32 %v2046, %v2238
        %v2240 = vpop.f32.mrb[0].mxu0
        %v2241 = vadd.f32 %v2048, %v2240
        %2242 = vmatprep.mubr.bf16.mxu0 0
        %2243 = vmatmul.mubr.bf16.gmra.mrb[0].mxu0 %v1577
        %v2244 = vpop.f32.mrb[0].mxu0
        %v2245 = vadd.f32 %v2052, %v2244
        %v2246 = vpop.f32.mrb[0].mxu0
        %v2247 = vadd.f32 %v2054, %v2246
        %v2248 = vpop.f32.mrb[0].mxu0
        %v2249 = vadd.f32 %v2056, %v2248
        %v2250 = vpop.f32.mrb[0].mxu0
        %v2251 = vadd.f32 %v2058, %v2250
        %2252 = vmatprep.mubr.bf16.mxu0 0
        %2253 = vmatmul.mubr.bf16.gmra.mrb[0].mxu0 %v1580
        %v2254 = vpop.f32.mrb[0].mxu0
        %v2255 = vadd.f32 %v2062, %v2254
        %v2256 = vpop.f32.mrb[0].mxu0
        %v2257 = vadd.f32 %v2064, %v2256
        %v2258 = vpop.f32.mrb[0].mxu0
        %v2259 = vadd.f32 %v2066, %v2258
        %v2260 = vpop.f32.mrb[0].mxu0
        %v2261 = vadd.f32 %v2068, %v2260
        %2262 = vmatprep.mubr.bf16.mxu0 0
        %2263 = vmatmul.mubr.bf16.gmra.mrb[0].mxu0 %v1583
        %v2264 = vpop.f32.mrb[0].mxu0
        %v2265 = vadd.f32 %v2072, %v2264
        %v2266 = vpop.f32.mrb[0].mxu0
        %v2267 = vadd.f32 %v2074, %v2266
        %v2268 = vpop.f32.mrb[0].mxu0
        %v2269 = vadd.f32 %v2076, %v2268
        %v2270 = vpop.f32.mrb[0].mxu0
        %v2271 = vadd.f32 %v2078, %v2270
        %2272 = vmatprep.mubr.bf16.mxu0 0
        %2273 = vmatmul.mubr.bf16.gmra.mrb[0].mxu0 %v1586
        %v2274 = vpop.f32.mrb[0].mxu0
        %v2275 = vadd.f32 %v2082, %v2274
        %v2276 = vpop.f32.mrb[0].mxu0
        %v2277 = vadd.f32 %v2084, %v2276
        %v2278 = vpop.f32.mrb[0].mxu0
        %v2279 = vadd.f32 %v2086, %v2278
        %v2280 = vpop.f32.mrb[0].mxu0
        %v2281 = vadd.f32 %v2088, %v2280
        %2282 = vmatprep.mubr.bf16.mxu0 0
        %2283 = vmatmul.mubr.bf16.gmra.mrb[0].mxu0 %v1589
        %v2284 = vpop.f32.mrb[0].mxu0
        %v2285 = vadd.f32 %v2092, %v2284
        %v2286 = vpop.f32.mrb[0].mxu0
        %v2287 = vadd.f32 %v2094, %v2286
        %v2288 = vpop.f32.mrb[0].mxu0
        %v2289 = vadd.f32 %v2096, %v2288
        %v2290 = vpop.f32.mrb[0].mxu0
        %v2291 = vadd.f32 %v2098, %v2290
        %2292 = vmatprep.mubr.bf16.mxu0 0
        %2293 = vmatmul.mubr.bf16.gmra.mrb[0].mxu0 %v1592
        %v2294 = vpop.f32.mrb[0].mxu0
        %v2295 = vadd.f32 %v2102, %v2294
        %v2296 = vpop.f32.mrb[0].mxu0
        %v2297 = vadd.f32 %v2104, %v2296
        %v2298 = vpop.f32.mrb[0].mxu0
        %v2299 = vadd.f32 %v2106, %v2298
        %v2300 = vpop.f32.mrb[0].mxu0
        %v2301 = vadd.f32 %v2108, %v2300
        %2302 = vmatprep.mubr.bf16.mxu0 0
        %2303 = vmatmul.mubr.bf16.gmra.mrb[0].mxu0 %v1595
        %v2304 = vpop.f32.mrb[0].mxu0
        %v2305 = vadd.f32 %v2112, %v2304
        %v2306 = vpop.f32.mrb[0].mxu0
        %v2307 = vadd.f32 %v2114, %v2306
        %v2308 = vpop.f32.mrb[0].mxu0
        %v2309 = vadd.f32 %v2116, %v2308
        %v2310 = vpop.f32.mrb[0].mxu0
        %v2311 = vadd.f32 %v2118, %v2310
        %2312 = vmatprep.mubr.bf16.mxu0 0
        %2313 = vmatmul.mubr.bf16.gmra.mrb[0].mxu0 %v1598
        %v2314 = vpop.f32.mrb[0].mxu0
        %v2315 = vadd.f32 %v2122, %v2314
        %v2316 = vpop.f32.mrb[0].mxu0
        %v2317 = vadd.f32 %v2124, %v2316
        %v2318 = vpop.f32.mrb[0].mxu0
        %v2319 = vadd.f32 %v2126, %v2318
        %v2320 = vpop.f32.mrb[0].mxu0
        %v2321 = vadd.f32 %v2128, %v2320
        %2322 = vmatprep.mubr.bf16.mxu0 0
        %2323 = vmatmul.mubr.bf16.gmra.mrb[0].mxu0 %v1601
        %v2324 = vpop.f32.mrb[0].mxu0
        %v2325 = vadd.f32 %v2132, %v2324
        %v2326 = vpop.f32.mrb[0].mxu0
        %v2327 = vadd.f32 %v2134, %v2326
        %v2328 = vpop.f32.mrb[0].mxu0
        %v2329 = vadd.f32 %v2136, %v2328
        %v2330 = vpop.f32.mrb[0].mxu0
        %v2331 = vadd.f32 %v2138, %v2330
        %2332 = vmatprep.mubr.bf16.mxu0 0
        %2333 = vmatmul.mubr.bf16.gmra.mrb[0].mxu0 %v1604
        %v2334 = vpop.f32.mrb[0].mxu0
        %v2335 = vadd.f32 %v2142, %v2334
        %v2336 = vpop.f32.mrb[0].mxu0
        %v2337 = vadd.f32 %v2144, %v2336
        %v2338 = vpop.f32.mrb[0].mxu0
        %v2339 = vadd.f32 %v2146, %v2338
        %v2340 = vpop.f32.mrb[0].mxu0
        %v2341 = vadd.f32 %v2148, %v2340
        %2342 = vmatprep.mubr.bf16.mxu0 0
        %2343 = vmatmul.mubr.bf16.gmra.mrb[0].mxu0 %v1607
        %v2344 = vpop.f32.mrb[0].mxu0
        %v2345 = vadd.f32 %v2152, %v2344
        %v2346 = vpop.f32.mrb[0].mxu0
        %v2347 = vadd.f32 %v2154, %v2346
        %v2348 = vpop.f32.mrb[0].mxu0
        %v2349 = vadd.f32 %v2156, %v2348
        %v2350 = vpop.f32.mrb[0].mxu0
        %v2351 = vadd.f32 %v2158, %v2350
        %2352 = vmatprep.mubr.bf16.mxu0 0
        %2353 = vmatmul.mubr.bf16.gmra.mrb[0].mxu0 %v1610
        %v2354 = vpop.f32.mrb[0].mxu0
        %v2355 = vadd.f32 %v2162, %v2354
        %v2356 = vpop.f32.mrb[0].mxu0
        %v2357 = vadd.f32 %v2164, %v2356
        %v2358 = vpop.f32.mrb[0].mxu0
        %v2359 = vadd.f32 %v2166, %v2358
        %v2360 = vpop.f32.mrb[0].mxu0
        %v2361 = vadd.f32 %v2168, %v2360
        %2362 = vmatprep.mubr.bf16.mxu0 0
        %2363 = vmatmul.mubr.bf16.gmra.mrb[0].mxu0 %v1613
        %v2364 = vpop.f32.mrb[0].mxu0
        %v2365 = vadd.f32 %v2172, %v2364
        %v2366 = vpop.f32.mrb[0].mxu0
        %v2367 = vadd.f32 %v2174, %v2366
        %v2368 = vpop.f32.mrb[0].mxu0
        %v2369 = vadd.f32 %v2176, %v2368
        %v2370 = vpop.f32.mrb[0].mxu0
        %v2371 = vadd.f32 %v2178, %v2370
        %2372 = vmatprep.mubr.bf16.mxu0 0
        %2373 = vmatmul.mubr.bf16.gmra.mrb[0].mxu0 %v1616
        %v2374 = vpop.f32.mrb[0].mxu0
        %v2375 = vadd.f32 %v2182, %v2374
        %v2376 = vpop.f32.mrb[0].mxu0
        %v2377 = vadd.f32 %v2184, %v2376
        %v2378 = vpop.f32.mrb[0].mxu0
        %v2379 = vadd.f32 %v2186, %v2378
        %v2380 = vpop.f32.mrb[0].mxu0
        %v2381 = vadd.f32 %v2188, %v2380
        %2382 = vmatprep.mubr.bf16.mxu0 0
        %2383 = vmatmul.mubr.bf16.gmra.mrb[0].mxu0 %v1619
        %v2384 = vpop.f32.mrb[0].mxu0
        %v2385 = vadd.f32 %v2192, %v2384
        %v2386 = vpop.f32.mrb[0].mxu0
        %v2387 = vadd.f32 %v2194, %v2386
        %v2388 = vpop.f32.mrb[0].mxu0
        %v2389 = vadd.f32 %v2196, %v2388
        %v2390 = vpop.f32.mrb[0].mxu0
        %v2391 = vadd.f32 %v2198, %v2390
        %2392 = vdwg.mxu0
        %v2393 = vmax.f32 %v2235, 0.0
        %v2394 = vmax.f32 %v2237, 0.0
        %v2395 = vmax.f32 %v2239, 0.0
        %v2396 = vmax.f32 %v2241, 0.0
        %v2397 = vmax.f32 %v2245, 0.0
        %v2398 = vmax.f32 %v2247, 0.0
        %v2399 = vmax.f32 %v2249, 0.0
        %v2400 = vmax.f32 %v2251, 0.0
        %v2401 = vmax.f32 %v2255, 0.0
        %v2402 = vmax.f32 %v2257, 0.0
        %v2403 = vmax.f32 %v2259, 0.0
        %v2404 = vmax.f32 %v2261, 0.0
        %v2405 = vmax.f32 %v2265, 0.0
        %v2406 = vmax.f32 %v2267, 0.0
        %v2407 = vmax.f32 %v2269, 0.0
        %v2408 = vmax.f32 %v2271, 0.0
        %v2409 = vmax.f32 %v2275, 0.0
        %v2410 = vmax.f32 %v2277, 0.0
        %v2411 = vmax.f32 %v2279, 0.0
        %v2412 = vmax.f32 %v2281, 0.0
        %v2413 = vmax.f32 %v2285, 0.0
        %v2414 = vmax.f32 %v2287, 0.0
        %v2415 = vmax.f32 %v2289, 0.0
        %v2416 = vmax.f32 %v2291, 0.0
        %v2417 = vmax.f32 %v2295, 0.0
        %v2418 = vmax.f32 %v2297, 0.0
        %v2419 = vmax.f32 %v2299, 0.0
        %v2420 = vmax.f32 %v2301, 0.0
        %v2421 = vmax.f32 %v2305, 0.0
        %v2422 = vmax.f32 %v2307, 0.0
        %v2423 = vmax.f32 %v2309, 0.0
        %v2424 = vmax.f32 %v2311, 0.0
        %v2425 = vmax.f32 %v2315, 0.0
        %v2426 = vmax.f32 %v2317, 0.0
        %v2427 = vmax.f32 %v2319, 0.0
        %v2428 = vmax.f32 %v2321, 0.0
        %v2429 = vmax.f32 %v2325, 0.0
        %v2430 = vmax.f32 %v2327, 0.0
        %v2431 = vmax.f32 %v2329, 0.0
        %v2432 = vmax.f32 %v2331, 0.0
        %v2433 = vmax.f32 %v2335, 0.0
        %v2434 = vmax.f32 %v2337, 0.0
        %v2435 = vmax.f32 %v2339, 0.0
        %v2436 = vmax.f32 %v2341, 0.0
        %v2437 = vmax.f32 %v2345, 0.0
        %v2438 = vmax.f32 %v2347, 0.0
        %v2439 = vmax.f32 %v2349, 0.0
        %v2440 = vmax.f32 %v2351, 0.0
        %v2441 = vmax.f32 %v2355, 0.0
        %v2442 = vmax.f32 %v2357, 0.0
        %v2443 = vmax.f32 %v2359, 0.0
        %v2444 = vmax.f32 %v2361, 0.0
        %v2445 = vmax.f32 %v2365, 0.0
        %v2446 = vmax.f32 %v2367, 0.0
        %v2447 = vmax.f32 %v2369, 0.0
        %v2448 = vmax.f32 %v2371, 0.0
        %v2449 = vmax.f32 %v2375, 0.0
        %v2450 = vmax.f32 %v2377, 0.0
        %v2451 = vmax.f32 %v2379, 0.0
        %v2452 = vmax.f32 %v2381, 0.0
        %v2453 = vmax.f32 %v2385, 0.0
        %v2454 = vmax.f32 %v2387, 0.0
        %v2455 = vmax.f32 %v2389, 0.0
        %v2456 = vmax.f32 %v2391, 0.0
        %v2457 = vpack.c.bf16 %v2395, %v2393
        %v2458 = vpack.c.bf16 %v2396, %v2394
        %v2459 = vpack.c.bf16 %v2399, %v2397
        %v2460 = vpack.c.bf16 %v2400, %v2398
        %v2461 = vpack.c.bf16 %v2403, %v2401
        %v2462 = vpack.c.bf16 %v2404, %v2402
        %v2463 = vpack.c.bf16 %v2407, %v2405
        %v2464 = vpack.c.bf16 %v2408, %v2406
        %v2465 = vpack.c.bf16 %v2411, %v2409
        %v2466 = vpack.c.bf16 %v2412, %v2410
        %v2467 = vpack.c.bf16 %v2415, %v2413
        %v2468 = vpack.c.bf16 %v2416, %v2414
        %v2469 = vpack.c.bf16 %v2419, %v2417
        %v2470 = vpack.c.bf16 %v2420, %v2418
        %v2471 = vpack.c.bf16 %v2423, %v2421
        %v2472 = vpack.c.bf16 %v2424, %v2422
        %v2473 = vpack.c.bf16 %v2427, %v2425
        %v2474 = vpack.c.bf16 %v2428, %v2426
        %v2475 = vpack.c.bf16 %v2431, %v2429
        %v2476 = vpack.c.bf16 %v2432, %v2430
        %v2477 = vpack.c.bf16 %v2435, %v2433
        %v2478 = vpack.c.bf16 %v2436, %v2434
        %v2479 = vpack.c.bf16 %v2439, %v2437
        %v2480 = vpack.c.bf16 %v2440, %v2438
        %v2481 = vpack.c.bf16 %v2443, %v2441
        %v2482 = vpack.c.bf16 %v2444, %v2442
        %v2483 = vpack.c.bf16 %v2447, %v2445
        %v2484 = vpack.c.bf16 %v2448, %v2446
        %v2485 = vpack.c.bf16 %v2451, %v2449
        %v2486 = vpack.c.bf16 %v2452, %v2450
        %v2487 = vpack.c.bf16 %v2455, %v2453
        %v2488 = vpack.c.bf16 %v2456, %v2454
        %v2489 = vld [vmem:[%s3] sm:$0xff]
        %v2490 = vld [vmem:[%s3 + $0x8] sm:$0xff]
        %v2491 = vld [vmem:[%s3 + $0x10] sm:$0xff]
        %v2492 = vld [vmem:[%s3 + $0x18] sm:$0xff]
        %v2493 = vld [vmem:[%s3 + $0x20] sm:$0xff]
        %v2494 = vld [vmem:[%s3 + $0x28] sm:$0xff]
        %v2495 = vld [vmem:[%s3 + $0x30] sm:$0xff]
        %v2496 = vld [vmem:[%s3 + $0x38] sm:$0xff]
        %v2497 = vld [vmem:[%s3 + $0x40] sm:$0xff]
        %v2498 = vld [vmem:[%s3 + $0x48] sm:$0xff]
        %v2499 = vld [vmem:[%s3 + $0x50] sm:$0xff]
        %v2500 = vld [vmem:[%s3 + $0x58] sm:$0xff]
        %v2501 = vld [vmem:[%s3 + $0x60] sm:$0xff]
        %v2502 = vld [vmem:[%s3 + $0x68] sm:$0xff]
        %v2503 = vld [vmem:[%s3 + $0x70] sm:$0xff]
        %v2504 = vld [vmem:[%s3 + $0x78] sm:$0xff]
        %v2505 = vld [vmem:[%s3 + $0x80] sm:$0xff]
        %v2506 = vld [vmem:[%s3 + $0x88] sm:$0xff]
        %v2507 = vld [vmem:[%s3 + $0x90] sm:$0xff]
        %v2508 = vld [vmem:[%s3 + $0x98] sm:$0xff]
        %v2509 = vld [vmem:[%s3 + $0xa0] sm:$0xff]
        %v2510 = vld [vmem:[%s3 + $0xa8] sm:$0xff]
        %v2511 = vld [vmem:[%s3 + $0xb0] sm:$0xff]
        %v2512 = vld [vmem:[%s3 + $0xb8] sm:$0xff]
        %v2513 = vld [vmem:[%s3 + $0xc0] sm:$0xff]
        %v2514 = vld [vmem:[%s3 + $0xc8] sm:$0xff]
        %v2515 = vld [vmem:[%s3 + $0xd0] sm:$0xff]
        %v2516 = vld [vmem:[%s3 + $0xd8] sm:$0xff]
        %v2517 = vld [vmem:[%s3 + $0xe0] sm:$0xff]
        %v2518 = vld [vmem:[%s3 + $0xe8] sm:$0xff]
        %v2519 = vld [vmem:[%s3 + $0xf0] sm:$0xff]
        %v2520 = vld [vmem:[%s3 + $0xf8] sm:$0xff]
        %v2521 = vld [vmem:[%s4] sm:$0x3]
        %v2523 = vlaneseq
        %v2524 = vshrl.u32 %v2523, 7
        %v2525 = vsub.s32 0, %v2524
        %v2526 = vrot.slane %v2521, %v2525
        %v2527 = vlaneseq
        %v2528 = vshrl.u32 %v2527, 7
        %v2529 = vsub.s32 1, %v2528
        %v2530 = vrot.slane %v2521, %v2529
        %v2565 = vunpack.c.l.b16 %v2489
        %v2566 = vunpack.c.h.b16 %v2489
        %v2567 = vunpack.c.l.b16 %v2490
        %v2568 = vunpack.c.h.b16 %v2490
        %v2569 = vunpack.c.l.b16 %v2491
        %v2570 = vunpack.c.h.b16 %v2491
        %v2571 = vunpack.c.l.b16 %v2492
        %v2572 = vunpack.c.h.b16 %v2492
        %v2573 = vunpack.c.l.b16 %v2493
        %v2574 = vunpack.c.h.b16 %v2493
        %v2575 = vunpack.c.l.b16 %v2494
        %v2576 = vunpack.c.h.b16 %v2494
        %v2577 = vunpack.c.l.b16 %v2495
        %v2578 = vunpack.c.h.b16 %v2495
        %v2579 = vunpack.c.l.b16 %v2496
        %v2580 = vunpack.c.h.b16 %v2496
        %v2581 = vunpack.c.l.b16 %v2497
        %v2582 = vunpack.c.h.b16 %v2497
        %v2583 = vunpack.c.l.b16 %v2498
        %v2584 = vunpack.c.h.b16 %v2498
        %v2585 = vunpack.c.l.b16 %v2499
        %v2586 = vunpack.c.h.b16 %v2499
        %v2587 = vunpack.c.l.b16 %v2500
        %v2588 = vunpack.c.h.b16 %v2500
        %v2589 = vunpack.c.l.b16 %v2501
        %v2590 = vunpack.c.h.b16 %v2501
        %v2591 = vunpack.c.l.b16 %v2502
        %v2592 = vunpack.c.h.b16 %v2502
        %v2593 = vunpack.c.l.b16 %v2503
        %v2594 = vunpack.c.h.b16 %v2503
        %v2595 = vunpack.c.l.b16 %v2504
        %v2596 = vunpack.c.h.b16 %v2504
        %v2597 = vunpack.c.l.b16 %v2505
        %v2598 = vunpack.c.h.b16 %v2505
        %v2599 = vunpack.c.l.b16 %v2506
        %v2600 = vunpack.c.h.b16 %v2506
        %v2601 = vunpack.c.l.b16 %v2507
        %v2602 = vunpack.c.h.b16 %v2507
        %v2603 = vunpack.c.l.b16 %v2508
        %v2604 = vunpack.c.h.b16 %v2508
        %v2605 = vunpack.c.l.b16 %v2509
        %v2606 = vunpack.c.h.b16 %v2509
        %v2607 = vunpack.c.l.b16 %v2510
        %v2608 = vunpack.c.h.b16 %v2510
        %v2609 = vunpack.c.l.b16 %v2511
        %v2610 = vunpack.c.h.b16 %v2511
        %v2611 = vunpack.c.l.b16 %v2512
        %v2612 = vunpack.c.h.b16 %v2512
        %v2613 = vunpack.c.l.b16 %v2513
        %v2614 = vunpack.c.h.b16 %v2513
        %v2615 = vunpack.c.l.b16 %v2514
        %v2616 = vunpack.c.h.b16 %v2514
        %v2617 = vunpack.c.l.b16 %v2515
        %v2618 = vunpack.c.h.b16 %v2515
        %v2619 = vunpack.c.l.b16 %v2516
        %v2620 = vunpack.c.h.b16 %v2516
        %v2621 = vunpack.c.l.b16 %v2517
        %v2622 = vunpack.c.h.b16 %v2517
        %v2623 = vunpack.c.l.b16 %v2518
        %v2624 = vunpack.c.h.b16 %v2518
        %v2625 = vunpack.c.l.b16 %v2519
        %v2626 = vunpack.c.h.b16 %v2519
        %v2627 = vunpack.c.l.b16 %v2520
        %v2628 = vunpack.c.h.b16 %v2520
        %v2629 = vpack.c.b16 %v2567, %v2565
        %v2630 = vpack.c.b16 %v2568, %v2566
        %v2631 = vpack.c.b16 %v2571, %v2569
        %v2632 = vpack.c.b16 %v2572, %v2570
        %v2633 = vpack.c.b16 %v2575, %v2573
        %v2634 = vpack.c.b16 %v2576, %v2574
        %v2635 = vpack.c.b16 %v2579, %v2577
        %v2636 = vpack.c.b16 %v2580, %v2578
        %v2637 = vpack.c.b16 %v2583, %v2581
        %v2638 = vpack.c.b16 %v2584, %v2582
        %v2639 = vpack.c.b16 %v2587, %v2585
        %v2640 = vpack.c.b16 %v2588, %v2586
        %v2641 = vpack.c.b16 %v2591, %v2589
        %v2642 = vpack.c.b16 %v2592, %v2590
        %v2643 = vpack.c.b16 %v2595, %v2593
        %v2644 = vpack.c.b16 %v2596, %v2594
        %v2645 = vpack.c.b16 %v2599, %v2597
        %v2646 = vpack.c.b16 %v2600, %v2598
        %v2647 = vpack.c.b16 %v2603, %v2601
        %v2648 = vpack.c.b16 %v2604, %v2602
        %v2649 = vpack.c.b16 %v2607, %v2605
        %v2650 = vpack.c.b16 %v2608, %v2606
        %v2651 = vpack.c.b16 %v2611, %v2609
        %v2652 = vpack.c.b16 %v2612, %v2610
        %v2653 = vpack.c.b16 %v2615, %v2613
        %v2654 = vpack.c.b16 %v2616, %v2614
        %v2655 = vpack.c.b16 %v2619, %v2617
        %v2656 = vpack.c.b16 %v2620, %v2618
        %v2657 = vpack.c.b16 %v2623, %v2621
        %v2658 = vpack.c.b16 %v2624, %v2622
        %v2659 = vpack.c.b16 %v2627, %v2625
        %v2660 = vpack.c.b16 %v2628, %v2626
        %2693 = vmatprep.subr.bf16.mxu0 %v2630
        %2694 = vmatpush1.bf16.msra.mxu0 %v2629
        %2695 = vmatprep.subr.bf16.mxu0 %v2632
        %2696 = vmatpush1.bf16.msra.mxu0 %v2631
        %2697 = vmatprep.subr.bf16.mxu0 %v2634
        %2698 = vmatpush1.bf16.msra.mxu0 %v2633
        %2699 = vmatprep.subr.bf16.mxu0 %v2636
        %2700 = vmatpush1.bf16.msra.mxu0 %v2635
        %2701 = vmatprep.subr.bf16.mxu0 %v2638
        %2702 = vmatpush1.bf16.msra.mxu0 %v2637
        %2703 = vmatprep.subr.bf16.mxu0 %v2640
        %2704 = vmatpush1.bf16.msra.mxu0 %v2639
        %2705 = vmatprep.subr.bf16.mxu0 %v2642
        %2706 = vmatpush1.bf16.msra.mxu0 %v2641
        %2707 = vmatprep.subr.bf16.mxu0 %v2644
        %2708 = vmatpush1.bf16.msra.mxu0 %v2643
        %2709 = vmatprep.subr.bf16.mxu0 %v2646
        %2710 = vmatpush1.bf16.msra.mxu0 %v2645
        %2711 = vmatprep.subr.bf16.mxu0 %v2648
        %2712 = vmatpush1.bf16.msra.mxu0 %v2647
        %2713 = vmatprep.subr.bf16.mxu0 %v2650
        %2714 = vmatpush1.bf16.msra.mxu0 %v2649
        %2715 = vmatprep.subr.bf16.mxu0 %v2652
        %2716 = vmatpush1.bf16.msra.mxu0 %v2651
        %2717 = vmatprep.subr.bf16.mxu0 %v2654
        %2718 = vmatpush1.bf16.msra.mxu0 %v2653
        %2719 = vmatprep.subr.bf16.mxu0 %v2656
        %2720 = vmatpush1.bf16.msra.mxu0 %v2655
        %2721 = vmatprep.subr.bf16.mxu0 %v2658
        %2722 = vmatpush1.bf16.msra.mxu0 %v2657
        %2723 = vmatprep.subr.bf16.mxu0 %v2660
        %2724 = vmatpush1.bf16.msra.mxu0 %v2659
        %2725 = vmatprep.mubr.bf16.mxu0 %v2458
        %2726 = vmatmul.mubr.bf16.gmra.mrb[0].mxu0 %v2457
        %v2727 = vpop.f32.mrb[0].mxu0
        %v2728 = vadd.f32 %v2526, %v2727
        %v2729 = vpop.f32.mrb[0].mxu0
        %v2730 = vadd.f32 %v2530, %v2729
        %v2731 = vpop.f32.mrb[0].mxu0
        %v2732 = vadd.f32 %v2526, %v2731
        %v2733 = vpop.f32.mrb[0].mxu0
        %v2734 = vadd.f32 %v2530, %v2733
        %2735 = vmatprep.mubr.bf16.mxu0 %v2460
        %2736 = vmatmul.mubr.bf16.gmra.mrb[0].mxu0 %v2459
        %v2737 = vpop.f32.mrb[0].mxu0
        %v2738 = vadd.f32 %v2526, %v2737
        %v2739 = vpop.f32.mrb[0].mxu0
        %v2740 = vadd.f32 %v2530, %v2739
        %v2741 = vpop.f32.mrb[0].mxu0
        %v2742 = vadd.f32 %v2526, %v2741
        %v2743 = vpop.f32.mrb[0].mxu0
        %v2744 = vadd.f32 %v2530, %v2743
        %2745 = vmatprep.mubr.bf16.mxu0 %v2462
        %2746 = vmatmul.mubr.bf16.gmra.mrb[0].mxu0 %v2461
        %v2747 = vpop.f32.mrb[0].mxu0
        %v2748 = vadd.f32 %v2526, %v2747
        %v2749 = vpop.f32.mrb[0].mxu0
        %v2750 = vadd.f32 %v2530, %v2749
        %v2751 = vpop.f32.mrb[0].mxu0
        %v2752 = vadd.f32 %v2526, %v2751
        %v2753 = vpop.f32.mrb[0].mxu0
        %v2754 = vadd.f32 %v2530, %v2753
        %2755 = vmatprep.mubr.bf16.mxu0 %v2464
        %2756 = vmatmul.mubr.bf16.gmra.mrb[0].mxu0 %v2463
        %v2757 = vpop.f32.mrb[0].mxu0
        %v2758 = vadd.f32 %v2526, %v2757
        %v2759 = vpop.f32.mrb[0].mxu0
        %v2760 = vadd.f32 %v2530, %v2759
        %v2761 = vpop.f32.mrb[0].mxu0
        %v2762 = vadd.f32 %v2526, %v2761
        %v2763 = vpop.f32.mrb[0].mxu0
        %v2764 = vadd.f32 %v2530, %v2763
        %2765 = vmatprep.mubr.bf16.mxu0 %v2466
        %2766 = vmatmul.mubr.bf16.gmra.mrb[0].mxu0 %v2465
        %v2767 = vpop.f32.mrb[0].mxu0
        %v2768 = vadd.f32 %v2526, %v2767
        %v2769 = vpop.f32.mrb[0].mxu0
        %v2770 = vadd.f32 %v2530, %v2769
        %v2771 = vpop.f32.mrb[0].mxu0
        %v2772 = vadd.f32 %v2526, %v2771
        %v2773 = vpop.f32.mrb[0].mxu0
        %v2774 = vadd.f32 %v2530, %v2773
        %2775 = vmatprep.mubr.bf16.mxu0 %v2468
        %2776 = vmatmul.mubr.bf16.gmra.mrb[0].mxu0 %v2467
        %v2777 = vpop.f32.mrb[0].mxu0
        %v2778 = vadd.f32 %v2526, %v2777
        %v2779 = vpop.f32.mrb[0].mxu0
        %v2780 = vadd.f32 %v2530, %v2779
        %v2781 = vpop.f32.mrb[0].mxu0
        %v2782 = vadd.f32 %v2526, %v2781
        %v2783 = vpop.f32.mrb[0].mxu0
        %v2784 = vadd.f32 %v2530, %v2783
        %2785 = vmatprep.mubr.bf16.mxu0 %v2470
        %2786 = vmatmul.mubr.bf16.gmra.mrb[0].mxu0 %v2469
        %v2787 = vpop.f32.mrb[0].mxu0
        %v2788 = vadd.f32 %v2526, %v2787
        %v2789 = vpop.f32.mrb[0].mxu0
        %v2790 = vadd.f32 %v2530, %v2789
        %v2791 = vpop.f32.mrb[0].mxu0
        %v2792 = vadd.f32 %v2526, %v2791
        %v2793 = vpop.f32.mrb[0].mxu0
        %v2794 = vadd.f32 %v2530, %v2793
        %2795 = vmatprep.mubr.bf16.mxu0 %v2472
        %2796 = vmatmul.mubr.bf16.gmra.mrb[0].mxu0 %v2471
        %v2797 = vpop.f32.mrb[0].mxu0
        %v2798 = vadd.f32 %v2526, %v2797
        %v2799 = vpop.f32.mrb[0].mxu0
        %v2800 = vadd.f32 %v2530, %v2799
        %v2801 = vpop.f32.mrb[0].mxu0
        %v2802 = vadd.f32 %v2526, %v2801
        %v2803 = vpop.f32.mrb[0].mxu0
        %v2804 = vadd.f32 %v2530, %v2803
        %2805 = vmatprep.mubr.bf16.mxu0 %v2474
        %2806 = vmatmul.mubr.bf16.gmra.mrb[0].mxu0 %v2473
        %v2807 = vpop.f32.mrb[0].mxu0
        %v2808 = vadd.f32 %v2526, %v2807
        %v2809 = vpop.f32.mrb[0].mxu0
        %v2810 = vadd.f32 %v2530, %v2809
        %v2811 = vpop.f32.mrb[0].mxu0
        %v2812 = vadd.f32 %v2526, %v2811
        %v2813 = vpop.f32.mrb[0].mxu0
        %v2814 = vadd.f32 %v2530, %v2813
        %2815 = vmatprep.mubr.bf16.mxu0 %v2476
        %2816 = vmatmul.mubr.bf16.gmra.mrb[0].mxu0 %v2475
        %v2817 = vpop.f32.mrb[0].mxu0
        %v2818 = vadd.f32 %v2526, %v2817
        %v2819 = vpop.f32.mrb[0].mxu0
        %v2820 = vadd.f32 %v2530, %v2819
        %v2821 = vpop.f32.mrb[0].mxu0
        %v2822 = vadd.f32 %v2526, %v2821
        %v2823 = vpop.f32.mrb[0].mxu0
        %v2824 = vadd.f32 %v2530, %v2823
        %2825 = vmatprep.mubr.bf16.mxu0 %v2478
        %2826 = vmatmul.mubr.bf16.gmra.mrb[0].mxu0 %v2477
        %v2827 = vpop.f32.mrb[0].mxu0
        %v2828 = vadd.f32 %v2526, %v2827
        %v2829 = vpop.f32.mrb[0].mxu0
        %v2830 = vadd.f32 %v2530, %v2829
        %v2831 = vpop.f32.mrb[0].mxu0
        %v2832 = vadd.f32 %v2526, %v2831
        %v2833 = vpop.f32.mrb[0].mxu0
        %v2834 = vadd.f32 %v2530, %v2833
        %2835 = vmatprep.mubr.bf16.mxu0 %v2480
        %2836 = vmatmul.mubr.bf16.gmra.mrb[0].mxu0 %v2479
        %v2837 = vpop.f32.mrb[0].mxu0
        %v2838 = vadd.f32 %v2526, %v2837
        %v2839 = vpop.f32.mrb[0].mxu0
        %v2840 = vadd.f32 %v2530, %v2839
        %v2841 = vpop.f32.mrb[0].mxu0
        %v2842 = vadd.f32 %v2526, %v2841
        %v2843 = vpop.f32.mrb[0].mxu0
        %v2844 = vadd.f32 %v2530, %v2843
        %2845 = vmatprep.mubr.bf16.mxu0 %v2482
        %2846 = vmatmul.mubr.bf16.gmra.mrb[0].mxu0 %v2481
        %v2847 = vpop.f32.mrb[0].mxu0
        %v2848 = vadd.f32 %v2526, %v2847
        %v2849 = vpop.f32.mrb[0].mxu0
        %v2850 = vadd.f32 %v2530, %v2849
        %v2851 = vpop.f32.mrb[0].mxu0
        %v2852 = vadd.f32 %v2526, %v2851
        %v2853 = vpop.f32.mrb[0].mxu0
        %v2854 = vadd.f32 %v2530, %v2853
        %2855 = vmatprep.mubr.bf16.mxu0 %v2484
        %2856 = vmatmul.mubr.bf16.gmra.mrb[0].mxu0 %v2483
        %v2857 = vpop.f32.mrb[0].mxu0
        %v2858 = vadd.f32 %v2526, %v2857
        %v2859 = vpop.f32.mrb[0].mxu0
        %v2860 = vadd.f32 %v2530, %v2859
        %v2861 = vpop.f32.mrb[0].mxu0
        %v2862 = vadd.f32 %v2526, %v2861
        %v2863 = vpop.f32.mrb[0].mxu0
        %v2864 = vadd.f32 %v2530, %v2863
        %2865 = vmatprep.mubr.bf16.mxu0 %v2486
        %2866 = vmatmul.mubr.bf16.gmra.mrb[0].mxu0 %v2485
        %v2867 = vpop.f32.mrb[0].mxu0
        %v2868 = vadd.f32 %v2526, %v2867
        %v2869 = vpop.f32.mrb[0].mxu0
        %v2870 = vadd.f32 %v2530, %v2869
        %v2871 = vpop.f32.mrb[0].mxu0
        %v2872 = vadd.f32 %v2526, %v2871
        %v2873 = vpop.f32.mrb[0].mxu0
        %v2874 = vadd.f32 %v2530, %v2873
        %2875 = vmatprep.mubr.bf16.mxu0 %v2488
        %2876 = vmatmul.mubr.bf16.gmra.mrb[0].mxu0 %v2487
        %v2877 = vpop.f32.mrb[0].mxu0
        %v2878 = vadd.f32 %v2526, %v2877
        %v2879 = vpop.f32.mrb[0].mxu0
        %v2880 = vadd.f32 %v2530, %v2879
        %v2881 = vpop.f32.mrb[0].mxu0
        %v2882 = vadd.f32 %v2526, %v2881
        %v2883 = vpop.f32.mrb[0].mxu0
        %v2884 = vadd.f32 %v2530, %v2883
        %2885 = vdwg.mxu0
        %v2886 = vpack.c.bf16 %v2732, %v2728
        %v2887 = vpack.c.bf16 %v2734, %v2730
        %v2888 = vpack.c.bf16 %v2742, %v2738
        %v2889 = vpack.c.bf16 %v2744, %v2740
        %v2890 = vpack.c.bf16 %v2752, %v2748
        %v2891 = vpack.c.bf16 %v2754, %v2750
        %v2892 = vpack.c.bf16 %v2762, %v2758
        %v2893 = vpack.c.bf16 %v2764, %v2760
        %v2894 = vpack.c.bf16 %v2772, %v2768
        %v2895 = vpack.c.bf16 %v2774, %v2770
        %v2896 = vpack.c.bf16 %v2782, %v2778
        %v2897 = vpack.c.bf16 %v2784, %v2780
        %v2898 = vpack.c.bf16 %v2792, %v2788
        %v2899 = vpack.c.bf16 %v2794, %v2790
        %v2900 = vpack.c.bf16 %v2802, %v2798
        %v2901 = vpack.c.bf16 %v2804, %v2800
        %v2902 = vpack.c.bf16 %v2812, %v2808
        %v2903 = vpack.c.bf16 %v2814, %v2810
        %v2904 = vpack.c.bf16 %v2822, %v2818
        %v2905 = vpack.c.bf16 %v2824, %v2820
        %v2906 = vpack.c.bf16 %v2832, %v2828
        %v2907 = vpack.c.bf16 %v2834, %v2830
        %v2908 = vpack.c.bf16 %v2842, %v2838
        %v2909 = vpack.c.bf16 %v2844, %v2840
        %v2910 = vpack.c.bf16 %v2852, %v2848
        %v2911 = vpack.c.bf16 %v2854, %v2850
        %v2912 = vpack.c.bf16 %v2862, %v2858
        %v2913 = vpack.c.bf16 %v2864, %v2860
        %v2914 = vpack.c.bf16 %v2872, %v2868
        %v2915 = vpack.c.bf16 %v2874, %v2870
        %v2916 = vpack.c.bf16 %v2882, %v2878
        %v2917 = vpack.c.bf16 %v2884, %v2880
        %v2918 = vld [vmem:[%s5] sm:$0xf]
        %v2919 = vld [vmem:[%s5 + $0x4] sm:$0xf]
        %v2920 = vld [vmem:[%s5 + $0x8] sm:$0xf]
        %v2921 = vld [vmem:[%s5 + $0xc] sm:$0xf]
        %v2922 = vld [vmem:[%s5 + $0x10] sm:$0xf]
        %v2923 = vld [vmem:[%s5 + $0x14] sm:$0xf]
        %v2924 = vld [vmem:[%s5 + $0x18] sm:$0xf]
        %v2925 = vld [vmem:[%s5 + $0x1c] sm:$0xf]
        %v2926 = vld [vmem:[%s5 + $0x20] sm:$0xf]
        %v2927 = vld [vmem:[%s5 + $0x24] sm:$0xf]
        %v2928 = vld [vmem:[%s5 + $0x28] sm:$0xf]
        %v2929 = vld [vmem:[%s5 + $0x2c] sm:$0xf]
        %v2930 = vld [vmem:[%s5 + $0x30] sm:$0xf]
        %v2931 = vld [vmem:[%s5 + $0x34] sm:$0xf]
        %v2932 = vld [vmem:[%s5 + $0x38] sm:$0xf]
        %v2933 = vld [vmem:[%s5 + $0x3c] sm:$0xf]
        %v2934 = vld [vmem:[%s5 + $0x40] sm:$0xf]
        %v2935 = vld [vmem:[%s5 + $0x44] sm:$0xf]
        %v2936 = vld [vmem:[%s5 + $0x48] sm:$0xf]
        %v2937 = vld [vmem:[%s5 + $0x4c] sm:$0xf]
        %v2938 = vld [vmem:[%s5 + $0x50] sm:$0xf]
        %v2939 = vld [vmem:[%s5 + $0x54] sm:$0xf]
        %v2940 = vld [vmem:[%s5 + $0x58] sm:$0xf]
        %v2941 = vld [vmem:[%s5 + $0x5c] sm:$0xf]
        %v2942 = vld [vmem:[%s5 + $0x60] sm:$0xf]
        %v2943 = vld [vmem:[%s5 + $0x64] sm:$0xf]
        %v2944 = vld [vmem:[%s5 + $0x68] sm:$0xf]
        %v2945 = vld [vmem:[%s5 + $0x6c] sm:$0xf]
        %v2946 = vld [vmem:[%s5 + $0x70] sm:$0xf]
        %v2947 = vld [vmem:[%s5 + $0x74] sm:$0xf]
        %v2948 = vld [vmem:[%s5 + $0x78] sm:$0xf]
        %v2949 = vld [vmem:[%s5 + $0x7c] sm:$0xf]
        %v2950 = vld [vmem:[%s6] sm:$0x1]
        %v2952 = vlaneseq
        %v2953 = vshrl.u32 %v2952, 7
        %v2954 = vsub.s32 0, %v2953
        %v2955 = vrot.slane %v2950, %v2954
        %v2989 = vunpack.c.l.b16 %v2918
        %v2990 = vunpack.c.l.b16 %v2919
        %v2991 = vunpack.c.l.b16 %v2920
        %v2992 = vunpack.c.l.b16 %v2921
        %v2993 = vunpack.c.l.b16 %v2922
        %v2994 = vunpack.c.l.b16 %v2923
        %v2995 = vunpack.c.l.b16 %v2924
        %v2996 = vunpack.c.l.b16 %v2925
        %v2997 = vunpack.c.l.b16 %v2926
        %v2998 = vunpack.c.l.b16 %v2927
        %v2999 = vunpack.c.l.b16 %v2928
        %v3000 = vunpack.c.l.b16 %v2929
        %v3001 = vunpack.c.l.b16 %v2930
        %v3002 = vunpack.c.l.b16 %v2931
        %v3003 = vunpack.c.l.b16 %v2932
        %v3004 = vunpack.c.l.b16 %v2933
        %v3005 = vunpack.c.l.b16 %v2934
        %v3006 = vunpack.c.l.b16 %v2935
        %v3007 = vunpack.c.l.b16 %v2936
        %v3008 = vunpack.c.l.b16 %v2937
        %v3009 = vunpack.c.l.b16 %v2938
        %v3010 = vunpack.c.l.b16 %v2939
        %v3011 = vunpack.c.l.b16 %v2940
        %v3012 = vunpack.c.l.b16 %v2941
        %v3013 = vunpack.c.l.b16 %v2942
        %v3014 = vunpack.c.l.b16 %v2943
        %v3015 = vunpack.c.l.b16 %v2944
        %v3016 = vunpack.c.l.b16 %v2945
        %v3017 = vunpack.c.l.b16 %v2946
        %v3018 = vunpack.c.l.b16 %v2947
        %v3019 = vunpack.c.l.b16 %v2948
        %v3020 = vunpack.c.l.b16 %v2949
        %v3021 = vpack.c.b16 %v2990, %v2989
        %v3022 = vpack.c.b16 %v2992, %v2991
        %v3023 = vpack.c.b16 %v2994, %v2993
        %v3024 = vpack.c.b16 %v2996, %v2995
        %v3025 = vpack.c.b16 %v2998, %v2997
        %v3026 = vpack.c.b16 %v3000, %v2999
        %v3027 = vpack.c.b16 %v3002, %v3001
        %v3028 = vpack.c.b16 %v3004, %v3003
        %v3029 = vpack.c.b16 %v3006, %v3005
        %v3030 = vpack.c.b16 %v3008, %v3007
        %v3031 = vpack.c.b16 %v3010, %v3009
        %v3032 = vpack.c.b16 %v3012, %v3011
        %v3033 = vpack.c.b16 %v3014, %v3013
        %v3034 = vpack.c.b16 %v3016, %v3015
        %v3035 = vpack.c.b16 %v3018, %v3017
        %v3036 = vpack.c.b16 %v3020, %v3019
        %3053 = vmatprep.subr.bf16.mxu0 0
        %3054 = vmatpush1.bf16.msra.mxu0 %v3021
        %3055 = vmatprep.subr.bf16.mxu0 0
        %3056 = vmatpush1.bf16.msra.mxu0 %v3022
        %3057 = vmatprep.subr.bf16.mxu0 0
        %3058 = vmatpush1.bf16.msra.mxu0 %v3023
        %3059 = vmatprep.subr.bf16.mxu0 0
        %3060 = vmatpush1.bf16.msra.mxu0 %v3024
        %3061 = vmatprep.subr.bf16.mxu0 0
        %3062 = vmatpush1.bf16.msra.mxu0 %v3025
        %3063 = vmatprep.subr.bf16.mxu0 0
        %3064 = vmatpush1.bf16.msra.mxu0 %v3026
        %3065 = vmatprep.subr.bf16.mxu0 0
        %3066 = vmatpush1.bf16.msra.mxu0 %v3027
        %3067 = vmatprep.subr.bf16.mxu0 0
        %3068 = vmatpush1.bf16.msra.mxu0 %v3028
        %3069 = vmatprep.subr.bf16.mxu0 0
        %3070 = vmatpush1.bf16.msra.mxu0 %v3029
        %3071 = vmatprep.subr.bf16.mxu0 0
        %3072 = vmatpush1.bf16.msra.mxu0 %v3030
        %3073 = vmatprep.subr.bf16.mxu0 0
        %3074 = vmatpush1.bf16.msra.mxu0 %v3031
        %3075 = vmatprep.subr.bf16.mxu0 0
        %3076 = vmatpush1.bf16.msra.mxu0 %v3032
        %3077 = vmatprep.subr.bf16.mxu0 0
        %3078 = vmatpush1.bf16.msra.mxu0 %v3033
        %3079 = vmatprep.subr.bf16.mxu0 0
        %3080 = vmatpush1.bf16.msra.mxu0 %v3034
        %3081 = vmatprep.subr.bf16.mxu0 0
        %3082 = vmatpush1.bf16.msra.mxu0 %v3035
        %3083 = vmatprep.subr.bf16.mxu0 0
        %3084 = vmatpush1.bf16.msra.mxu0 %v3036
        %3085 = vmatprep.mubr.bf16.mxu0 %v2887
        %3086 = vmatmul.mubr.bf16.gmra.mrb[0].mxu0 %v2886
        %v3087 = vpop.f32.mrb[0].mxu0
        %v3088 = vadd.f32 %v2955, %v3087
        %v3089 = vpop.f32.mrb[0].mxu0
        %v3090 = vpop.f32.mrb[0].mxu0
        %v3091 = vadd.f32 %v2955, %v3090
        %v3092 = vpop.f32.mrb[0].mxu0
        %3093 = vmatprep.mubr.bf16.mxu0 %v2889
        %3094 = vmatmul.mubr.bf16.gmra.mrb[0].mxu0 %v2888
        %v3095 = vpop.f32.mrb[0].mxu0
        %v3096 = vadd.f32 %v2955, %v3095
        %v3097 = vpop.f32.mrb[0].mxu0
        %v3098 = vpop.f32.mrb[0].mxu0
        %v3099 = vadd.f32 %v2955, %v3098
        %v3100 = vpop.f32.mrb[0].mxu0
        %3101 = vmatprep.mubr.bf16.mxu0 %v2891
        %3102 = vmatmul.mubr.bf16.gmra.mrb[0].mxu0 %v2890
        %v3103 = vpop.f32.mrb[0].mxu0
        %v3104 = vadd.f32 %v2955, %v3103
        %v3105 = vpop.f32.mrb[0].mxu0
        %v3106 = vpop.f32.mrb[0].mxu0
        %v3107 = vadd.f32 %v2955, %v3106
        %v3108 = vpop.f32.mrb[0].mxu0
        %3109 = vmatprep.mubr.bf16.mxu0 %v2893
        %3110 = vmatmul.mubr.bf16.gmra.mrb[0].mxu0 %v2892
        %v3111 = vpop.f32.mrb[0].mxu0
        %v3112 = vadd.f32 %v2955, %v3111
        %v3113 = vpop.f32.mrb[0].mxu0
        %v3114 = vpop.f32.mrb[0].mxu0
        %v3115 = vadd.f32 %v2955, %v3114
        %v3116 = vpop.f32.mrb[0].mxu0
        %3117 = vmatprep.mubr.bf16.mxu0 %v2895
        %3118 = vmatmul.mubr.bf16.gmra.mrb[0].mxu0 %v2894
        %v3119 = vpop.f32.mrb[0].mxu0
        %v3120 = vadd.f32 %v2955, %v3119
        %v3121 = vpop.f32.mrb[0].mxu0
        %v3122 = vpop.f32.mrb[0].mxu0
        %v3123 = vadd.f32 %v2955, %v3122
        %v3124 = vpop.f32.mrb[0].mxu0
        %3125 = vmatprep.mubr.bf16.mxu0 %v2897
        %3126 = vmatmul.mubr.bf16.gmra.mrb[0].mxu0 %v2896
        %v3127 = vpop.f32.mrb[0].mxu0
        %v3128 = vadd.f32 %v2955, %v3127
        %v3129 = vpop.f32.mrb[0].mxu0
        %v3130 = vpop.f32.mrb[0].mxu0
        %v3131 = vadd.f32 %v2955, %v3130
        %v3132 = vpop.f32.mrb[0].mxu0
        %3133 = vmatprep.mubr.bf16.mxu0 %v2899
        %3134 = vmatmul.mubr.bf16.gmra.mrb[0].mxu0 %v2898
        %v3135 = vpop.f32.mrb[0].mxu0
        %v3136 = vadd.f32 %v2955, %v3135
        %v3137 = vpop.f32.mrb[0].mxu0
        %v3138 = vpop.f32.mrb[0].mxu0
        %v3139 = vadd.f32 %v2955, %v3138
        %v3140 = vpop.f32.mrb[0].mxu0
        %3141 = vmatprep.mubr.bf16.mxu0 %v2901
        %3142 = vmatmul.mubr.bf16.gmra.mrb[0].mxu0 %v2900
        %v3143 = vpop.f32.mrb[0].mxu0
        %v3144 = vadd.f32 %v2955, %v3143
        %v3145 = vpop.f32.mrb[0].mxu0
        %v3146 = vpop.f32.mrb[0].mxu0
        %v3147 = vadd.f32 %v2955, %v3146
        %v3148 = vpop.f32.mrb[0].mxu0
        %3149 = vmatprep.mubr.bf16.mxu0 %v2903
        %3150 = vmatmul.mubr.bf16.gmra.mrb[0].mxu0 %v2902
        %v3151 = vpop.f32.mrb[0].mxu0
        %v3152 = vadd.f32 %v2955, %v3151
        %v3153 = vpop.f32.mrb[0].mxu0
        %v3154 = vpop.f32.mrb[0].mxu0
        %v3155 = vadd.f32 %v2955, %v3154
        %v3156 = vpop.f32.mrb[0].mxu0
        %3157 = vmatprep.mubr.bf16.mxu0 %v2905
        %3158 = vmatmul.mubr.bf16.gmra.mrb[0].mxu0 %v2904
        %v3159 = vpop.f32.mrb[0].mxu0
        %v3160 = vadd.f32 %v2955, %v3159
        %v3161 = vpop.f32.mrb[0].mxu0
        %v3162 = vpop.f32.mrb[0].mxu0
        %v3163 = vadd.f32 %v2955, %v3162
        %v3164 = vpop.f32.mrb[0].mxu0
        %3165 = vmatprep.mubr.bf16.mxu0 %v2907
        %3166 = vmatmul.mubr.bf16.gmra.mrb[0].mxu0 %v2906
        %v3167 = vpop.f32.mrb[0].mxu0
        %v3168 = vadd.f32 %v2955, %v3167
        %v3169 = vpop.f32.mrb[0].mxu0
        %v3170 = vpop.f32.mrb[0].mxu0
        %v3171 = vadd.f32 %v2955, %v3170
        %v3172 = vpop.f32.mrb[0].mxu0
        %3173 = vmatprep.mubr.bf16.mxu0 %v2909
        %3174 = vmatmul.mubr.bf16.gmra.mrb[0].mxu0 %v2908
        %v3175 = vpop.f32.mrb[0].mxu0
        %v3176 = vadd.f32 %v2955, %v3175
        %v3177 = vpop.f32.mrb[0].mxu0
        %v3178 = vpop.f32.mrb[0].mxu0
        %v3179 = vadd.f32 %v2955, %v3178
        %v3180 = vpop.f32.mrb[0].mxu0
        %3181 = vmatprep.mubr.bf16.mxu0 %v2911
        %3182 = vmatmul.mubr.bf16.gmra.mrb[0].mxu0 %v2910
        %v3183 = vpop.f32.mrb[0].mxu0
        %v3184 = vadd.f32 %v2955, %v3183
        %v3185 = vpop.f32.mrb[0].mxu0
        %v3186 = vpop.f32.mrb[0].mxu0
        %v3187 = vadd.f32 %v2955, %v3186
        %v3188 = vpop.f32.mrb[0].mxu0
        %3189 = vmatprep.mubr.bf16.mxu0 %v2913
        %3190 = vmatmul.mubr.bf16.gmra.mrb[0].mxu0 %v2912
        %v3191 = vpop.f32.mrb[0].mxu0
        %v3192 = vadd.f32 %v2955, %v3191
        %v3193 = vpop.f32.mrb[0].mxu0
        %v3194 = vpop.f32.mrb[0].mxu0
        %v3195 = vadd.f32 %v2955, %v3194
        %v3196 = vpop.f32.mrb[0].mxu0
        %3197 = vmatprep.mubr.bf16.mxu0 %v2915
        %3198 = vmatmul.mubr.bf16.gmra.mrb[0].mxu0 %v2914
        %v3199 = vpop.f32.mrb[0].mxu0
        %v3200 = vadd.f32 %v2955, %v3199
        %v3201 = vpop.f32.mrb[0].mxu0
        %v3202 = vpop.f32.mrb[0].mxu0
        %v3203 = vadd.f32 %v2955, %v3202
        %v3204 = vpop.f32.mrb[0].mxu0
        %3205 = vmatprep.mubr.bf16.mxu0 %v2917
        %3206 = vmatmul.mubr.bf16.gmra.mrb[0].mxu0 %v2916
        %v3207 = vpop.f32.mrb[0].mxu0
        %v3208 = vadd.f32 %v2955, %v3207
        %v3209 = vpop.f32.mrb[0].mxu0
        %v3210 = vpop.f32.mrb[0].mxu0
        %v3211 = vadd.f32 %v2955, %v3210
        %v3212 = vpop.f32.mrb[0].mxu0
        %3213 = vdwg.mxu0
        %3214 = vst [vmem:[%s274] sm:$0xff] %v3088
        %3215 = vst [vmem:[%s274 + $0x8] sm:$0xff] %v3091
        %3216 = vst [vmem:[%s274 + $0x10] sm:$0xff] %v3096
        %3217 = vst [vmem:[%s274 + $0x18] sm:$0xff] %v3099
        %3218 = vst [vmem:[%s274 + $0x20] sm:$0xff] %v3104
        %3219 = vst [vmem:[%s274 + $0x28] sm:$0xff] %v3107
        %3220 = vst [vmem:[%s274 + $0x30] sm:$0xff] %v3112
        %3221 = vst [vmem:[%s274 + $0x38] sm:$0xff] %v3115
        %3222 = vst [vmem:[%s274 + $0x40] sm:$0xff] %v3120
        %3223 = vst [vmem:[%s274 + $0x48] sm:$0xff] %v3123
        %3224 = vst [vmem:[%s274 + $0x50] sm:$0xff] %v3128
        %3225 = vst [vmem:[%s274 + $0x58] sm:$0xff] %v3131
        %3226 = vst [vmem:[%s274 + $0x60] sm:$0xff] %v3136
        %3227 = vst [vmem:[%s274 + $0x68] sm:$0xff] %v3139
        %3228 = vst [vmem:[%s274 + $0x70] sm:$0xff] %v3144
        %3229 = vst [vmem:[%s274 + $0x78] sm:$0xff] %v3147
        %3230 = vst [vmem:[%s274 + $0x80] sm:$0xff] %v3152
        %3231 = vst [vmem:[%s274 + $0x88] sm:$0xff] %v3155
        %3232 = vst [vmem:[%s274 + $0x90] sm:$0xff] %v3160
        %3233 = vst [vmem:[%s274 + $0x98] sm:$0xff] %v3163
        %3234 = vst [vmem:[%s274 + $0xa0] sm:$0xff] %v3168
        %3235 = vst [vmem:[%s274 + $0xa8] sm:$0xff] %v3171
        %3236 = vst [vmem:[%s274 + $0xb0] sm:$0xff] %v3176
        %3237 = vst [vmem:[%s274 + $0xb8] sm:$0xff] %v3179
        %3238 = vst [vmem:[%s274 + $0xc0] sm:$0xff] %v3184
        %3239 = vst [vmem:[%s274 + $0xc8] sm:$0xff] %v3187
        %3240 = vst [vmem:[%s274 + $0xd0] sm:$0xff] %v3192
        %3241 = vst [vmem:[%s274 + $0xd8] sm:$0xff] %v3195
        %3242 = vst [vmem:[%s274 + $0xe0] sm:$0xff] %v3200
        %3243 = vst [vmem:[%s274 + $0xe8] sm:$0xff] %v3203
        %3244 = vst [vmem:[%s274 + $0xf0] sm:$0xff] %v3208
        %3245 = vst [vmem:[%s274 + $0xf8] sm:$0xff] %v3211
        %s3246 = sand.u32 %s181, 1
        %s3247 = scalar_lea.sflag [#allocation3], %s3246
        %s3248 = sand.u32 %s181, 1
        %s3249 = smul.addr %s3248, 256
        %s3250 = scalar_lea.vmem [#allocation2], %s3249
        // Predicated region
        $region49: #{tpu_custom_call.1} parent=47 // pred_check
          %p3251 = pneg %p191
        $region50: #{tpu_custom_call.1} parent=47 // pred_check_branch
          %3253 = sbr.rel (%p3251) target = $region52
        $region51: #{tpu_custom_call.1} parent=47 // pred_region
          %s3254 = smul.u32 32, %s21
          %s3256 = ssub.s32 4096, 4096
          %3257 = vsyncadd %s3247, %s3256
          %s3258 = smul.addr %s3254, 128
          %s3259 = scalar_lea.hbm %s7, %s3258
          %s3260 = sshll.u32 %s3250, 4
          %s3261 = int_to_ptr.vmem [resolvable:$true] %s3260
          %3266 = dma.vmem_to_hbm [thread:$0]  %s3261, 4096, %s3259, %s3247, 128, 128, 8
        $region52: #{tpu_custom_call.1} parent=47 // pred_fallthru
          _
      $region48: #{tpu_custom_call.1} parent=5 // pred_fallthru
        _
      %p3267 = scmp.le.s32.totalorder 2, %s16
      // Predicated region
      $region53: #{tpu_custom_call.1} parent=5 // pred_check
        %p3268 = pneg %p3267
      $region54: #{tpu_custom_call.1} parent=5 // pred_check_branch
        %3270 = sbr.rel (%p3268) target = $region56
      $region55: #{tpu_custom_call.1} parent=5 // pred_region
        %s3271 = ssub.s32 %s16, 2
        // Predicated region
        $region57: #{tpu_custom_call.1} parent=55 // pred_check
          %p3272 = pneg %p197
        $region58: #{tpu_custom_call.1} parent=55 // pred_check_branch
          %3274 = sbr.rel (%p3272) target = $region60
        $region59: #{tpu_custom_call.1} parent=55 // pred_region
          %s3275 = sand.u32 %s182, 1
          %s3276 = scalar_lea.sflag [#allocation3], %s3275
          %s3277 = sand.u32 %s182, 1
          %s3278 = smul.addr %s3277, 256
          %s3279 = scalar_lea.vmem [#allocation2], %s3278
          %3280 = dma.done %s3276, 4096
        $region60: #{tpu_custom_call.1} parent=55 // pred_fallthru
          _
      $region56: #{tpu_custom_call.1} parent=5 // pred_fallthru
        _
    $region6: #{tpu_custom_call.1} parent=1 // loop_footer
      %s20 = sadd.s32 1, %s16
    $region7: #{tpu_custom_call.1} parent=1 // loop_footer_branch
      %15 = sbr.rel target = $region3
    $region8: #{tpu_custom_call.1} parent=1 // loop_exit
      _
    %3281 = vsyncpa [#allocation3], 1
    %s3282 = scalar_lea.sflag [#allocation3], 1
    %3283 = vsyncpa %s3282, 1

</llo_original>
